<compile_context>
chip_gen: v5e
topology: v5e:2x2
jax: 0.10.0
libtpu: 0.0.40
codegen_flags: <defaults>
</compile_context>

<pallas_src>
import jax
import jax.numpy as jnp
import numpy as np
from jax.experimental import pallas as pl
from jax.experimental.pallas import tpu as pltpu

POOL_KS = (2, 3, 5, 6)
_N_LAYERS = len(POOL_KS)
_CHAN_CHUNK = 8          # channels processed per pooling/conv accumulation step


def _interp_matrix(out_size, in_size):
    """PyTorch bilinear interpolation matrix, align_corners=False. (out_size, in_size)."""
    scale = in_size / out_size
    dst = jnp.arange(out_size, dtype=jnp.float32)
    src = jnp.maximum(scale * (dst + 0.5) - 0.5, 0.0)
    i0 = jnp.clip(jnp.floor(src).astype(jnp.int32), 0, in_size - 1)
    i1 = jnp.minimum(i0 + 1, in_size - 1)
    frac = src - i0.astype(jnp.float32)
    cols = jnp.arange(in_size, dtype=jnp.int32)
    return ((1.0 - frac)[:, None] * (cols[None, :] == i0[:, None]).astype(jnp.float32)
            + frac[:, None] * (cols[None, :] == i1[:, None]).astype(jnp.float32))


def _fold_matrix(full_size, k):
    """B = A_interp @ S_stride for one spatial direction.

    A_interp: (full_size, n) bilinear upsample matrix, n = full_size // k.
    S_stride: (n, m) 0/1 matrix selecting every k-th position of the length-m
              windowed-max map, m = n*k - (k-1).
    B (full_size, m) performs "pick the pooled values, then bilinear upsample"
    in one matmul, so the kernel never needs strided/gather indexing.
    """
    n = full_size // k
    m = n * k - (k - 1)
    a = _interp_matrix(full_size, n)                       # (full, n)
    sel = jnp.zeros((n, m), jnp.float32)
    sel = sel.at[jnp.arange(n), jnp.arange(n) * k].set(1.0)
    return a @ sel                                         # (full, m)


def _chan_chunks(C):
    cc = min(C, _CHAN_CHUNK)
    return [(c0, min(cc, C - c0)) for c0 in range(0, C, cc)]


def _spp_kernel(x_ref, w_ref, b_ref,
                bh1, bw1, bh2, bw2, bh3, bw3, bh4, bw4,
                out_ref):
    BN, C, H, W = x_ref.shape
    bhs = (bh1, bh2, bh3, bh4)
    bws = (bw1, bw2, bw3, bw4)
    chunks = _chan_chunks(C)

    # --- pass-through of x into the trailing output channels, retired first,
    #     chunked so no whole-block value stays live across the scale loop ----
    for c0, cc in chunks:
        out_ref[:, _N_LAYERS + c0:_N_LAYERS + c0 + cc, :, :] = \
            x_ref[:, c0:c0 + cc, :, :]

    for s, k in enumerate(POOL_KS):
        hk, wk = H // k, W // k
        mh = hk * k - (k - 1)              # rows that start a full k-window
        mw = wk * k - (k - 1)

        # --- pooling + shared 1x1 conv (C -> 1) accumulated per channel chunk.
        #     Live set per chunk: (BN, cc, *) slices + the (BN, mh, mw) f32
        #     accumulator -- never a full (BN, C, mh, mw) product. ------------
        acc = jnp.zeros((BN, mh, mw), jnp.float32)
        for c0, cc in chunks:
            xc = x_ref[:, c0:c0 + cc, :, :]                    # (BN, cc, H, W)
            # separable windowed max: k shifted contiguous slices folded with
            # jnp.maximum (no per-window slicing, no concatenate relayouts)
            hmax = xc[:, :, 0:mh, :]
            for i in range(1, k):
                hmax = jnp.maximum(hmax, xc[:, :, i:i + mh, :])
            wmax = hmax[:, :, :, 0:mw]
            for j in range(1, k):
                wmax = jnp.maximum(wmax, hmax[:, :, :, j:j + mw])  # (BN,cc,mh,mw)
            wc = w_ref[c0:c0 + cc, :, :]                       # (cc, 1, 1) f32
            acc = acc + jnp.sum(wc[None] * wmax, axis=1)       # f32 accumulate
        conv = acc + b_ref[...]                                # (BN, mh, mw)

        # --- stride-select + bilinear upsample as two batched MXU matmuls; the
        #     W-side matmul runs first so the intermediate is lane-dense -------
        bw_b = jnp.broadcast_to(bws[s][...], (BN, W, mw))      # tiny (<= H*mh f32 / elem)
        tmp = jnp.einsum('bmn,bwn->bmw', conv, bw_b,
                         preferred_element_type=jnp.float32)   # (BN, mh, W)
        bh_b = jnp.broadcast_to(bhs[s][...], (BN, H, mh))
        up = jnp.einsum('bhm,bmw->bhw', bh_b, tmp,
                        preferred_element_type=jnp.float32)    # (BN, H, W)
        out_ref[:, s, :, :] = up.astype(out_ref.dtype)


def _tpu_limits():
    """(per-core VMEM bytes, whether the chip has >1 TensorCore per device)."""
    vmem_cap = 64 << 20          # conservative default (v7x-sized)
    multi_tc = True              # conservative: keep >=2 grid steps if possible
    try:
        vmem_cap = int(pltpu.get_tpu_info().vmem_capacity_bytes)
    except Exception:
        pass
    try:
        kind = jax.devices()[0].device_kind.lower()
        # v5e / v6e ("lite" chips) expose a single TensorCore per device:
        # a grid of 1 step with maximal bn is strictly better there.
        if "lite" in kind or "v5e" in kind or "v6e" in kind:
            multi_tc = False
    except Exception:
        pass
    return vmem_cap, multi_tc


def _pick_block_batch(N, C, H, W, itemsize, vmem_cap, multi_tc):
    """Batch elements per grid step, sized from actual (padded) VMEM usage.

    Counts double-buffered in+out blocks plus the in-kernel temporaries
    (channel-chunk slices, f32 accumulator / matmul temps), using (8,128)
    tile-padded slab sizes.  Budget ~35% of physical VMEM (capped at 40 MiB)
    leaves headroom for Mosaic internal scratch on v7x's 64 MiB.
    """
    Hp = -(-H // 8) * 8
    Wp = -(-W // 128) * 128
    slab_in = Hp * Wp * itemsize            # one (H, W) channel slab, activation dtype
    slab_f32 = Hp * Wp * 4                  # f32 temporaries
    cc = min(C, _CHAN_CHUNK)
    per_elem = (2 * C * slab_in                     # input block, double-buffered
                + 2 * (C + _N_LAYERS) * slab_in     # output block, double-buffered
                + (3 * cc + 2) * slab_f32           # xc / hmax / wmax chunk + product
                + 6 * slab_f32)                     # acc, matmul temps, broadcasts, up
    budget = min(int(0.35 * vmem_cap), 40 << 20)
    bn_fit = max(1, min(N, budget // max(per_elem, 1)))
    divs = [d for d in range(1, N + 1) if N % d == 0 and d <= bn_fit] or [1]
    if multi_tc and N >= 2:
        two = [d for d in divs if N // d >= 2]
        if two and 2 * max(two) >= max(divs):
            # prefer an even step count (balanced across both TCs) when it does
            # not shrink the block by more than 2x
            even = [d for d in two if (N // d) % 2 == 0]
            if even and 2 * max(even) >= max(two):
                return max(even)
            return max(two)
    return max(divs)


def spp_block(x, w, b):
    N, C, H, W = x.shape
    assert H >= max(POOL_KS) and W >= max(POOL_KS), "spatial dims too small for SPP pooling"

    # precomputed (upsample @ stride-select) matrices, one pair per pool scale (tiny glue)
    mats = []
    for k in POOL_KS:
        mats.append(_fold_matrix(H, k))    # B_h: (H, mh_k)
        mats.append(_fold_matrix(W, k))    # B_w: (W, mw_k)

    vmem_cap, multi_tc = _tpu_limits()
    bn = _pick_block_batch(N, C, H, W, jnp.dtype(x.dtype).itemsize, vmem_cap, multi_tc)
    vmem_limit = max(32 << 20, min(int(0.75 * vmem_cap), 96 << 20))

    def bcast_spec(shape):
        nd = len(shape)
        return pl.BlockSpec(shape, lambda n, _nd=nd: (0,) * _nd)

    in_specs = [pl.BlockSpec((bn, C, H, W), lambda n: (n, 0, 0, 0)),
                bcast_spec((C, 1, 1)),
                bcast_spec((1, 1))]
    in_specs += [bcast_spec(tuple(m.shape)) for m in mats]
    out_spec = pl.BlockSpec((bn, _N_LAYERS + C, H, W), lambda n: (n, 0, 0, 0))

    fn = pl.pallas_call(
        _spp_kernel,
        out_shape=jax.ShapeDtypeStruct((N, _N_LAYERS + C, H, W), x.dtype),
        grid_spec=pltpu.PrefetchScalarGridSpec(
            num_scalar_prefetch=0,
            grid=(N // bn,),
            in_specs=in_specs,
            out_specs=out_spec),
        compiler_params=pltpu.CompilerParams(
            dimension_semantics=("parallel",),
            vmem_limit_bytes=vmem_limit),
    )
    # NOTE: the kernel is HBM-bandwidth bound; bf16 activations halve traffic.
    # It is dtype-generic (pooling/pass-through stay in x.dtype, conv/upsample
    # accumulate in f32), so callers may pass bf16 x directly.
    return fn(x, w, b, *mats)


def _reference(x, w, b):
    """Pure-JAX reference with identical semantics (for verification)."""
    N, C, H, W = x.shape
    wvec = w.reshape(C)
    layers = []
    for k in POOL_KS:
        hk, wk = H // k, W // k
        xc = x[:, :, :hk * k, :wk * k].reshape(N, C, hk, k, wk, k)
        pooled = xc.max(axis=(3, 5))
        conv = jnp.einsum('nchw,c->nhw', pooled, wvec) + b[0, 0]
        ah = _interp_matrix(H, hk)
        aw = _interp_matrix(W, wk)
        up = jnp.einsum('hp,npq,wq->nhw', ah, conv, aw)
        layers.append(up[:, None, :, :])
    return jnp.concatenate(layers + [x], axis=1)


if __name__ == "__main__":
    key = jax.random.PRNGKey(0)
    kx, kw, kb = jax.random.split(key, 3)
    N, C, H, W = 2, 4, 16, 16

    x = jax.random.normal(kx, (N, C, H, W), dtype=jnp.float32)
    # Conv2d(C, 1, kernel_size=1): weight (1,C,1,1) stored as (C,1,1), bias (1,) stored as (1,1)
    w = jax.random.uniform(kw, (C, 1, 1), dtype=jnp.float32, minval=-0.5, maxval=0.5)
    b = jax.random.uniform(kb, (1, 1), dtype=jnp.float32, minval=-0.5, maxval=0.5)

    out = spp_block(x, w, b)
    out = jax.block_until_ready(out)

    ref = _reference(x, w, b)
    assert out.shape == (N, C + _N_LAYERS, H, W)
    np.testing.assert_allclose(np.asarray(out), np.asarray(ref), rtol=1e-2, atol=1e-2)

    print("KERNEL_OK")
</pallas_src>

<mosaic_0001>
module attributes {stable_mosaic.version = 11 : i64} {
  func.func @_spp_kernel(%arg0: i32, %arg1: memref<1x4x16x16xf32, #tpu.memory_space<vmem>>, %arg2: memref<4x1x1xf32, #tpu.memory_space<vmem>>, %arg3: memref<1x1xf32, #tpu.memory_space<vmem>>, %arg4: memref<16x15xf32, #tpu.memory_space<vmem>>, %arg5: memref<16x15xf32, #tpu.memory_space<vmem>>, %arg6: memref<16x13xf32, #tpu.memory_space<vmem>>, %arg7: memref<16x13xf32, #tpu.memory_space<vmem>>, %arg8: memref<16x11xf32, #tpu.memory_space<vmem>>, %arg9: memref<16x11xf32, #tpu.memory_space<vmem>>, %arg10: memref<16x7xf32, #tpu.memory_space<vmem>>, %arg11: memref<16x7xf32, #tpu.memory_space<vmem>>, %arg12: memref<1x8x16x16xf32, #tpu.memory_space<vmem>>) attributes {dimension_semantics = [#tpu.dimension_semantics<parallel>], iteration_bounds = array<i64: 2>, scalar_prefetch = 0 : i64, scratch_operands = 0 : i64, tpu.core_type = #tpu.core_type<tc>, window_params = [{transform_indices = @transform_0, window_bounds = array<i64: 1, 4, 16, 16>}, {pipeline_mode = #tpu.pipeline_mode<synchronous>, transform_indices = @transform_1, window_bounds = array<i64: 4, 1, 1>}, {pipeline_mode = #tpu.pipeline_mode<synchronous>, transform_indices = @transform_2, window_bounds = array<i64: 1, 1>}, {pipeline_mode = #tpu.pipeline_mode<synchronous>, transform_indices = @transform_3, window_bounds = array<i64: 16, 15>}, {pipeline_mode = #tpu.pipeline_mode<synchronous>, transform_indices = @transform_4, window_bounds = array<i64: 16, 15>}, {pipeline_mode = #tpu.pipeline_mode<synchronous>, transform_indices = @transform_5, window_bounds = array<i64: 16, 13>}, {pipeline_mode = #tpu.pipeline_mode<synchronous>, transform_indices = @transform_6, window_bounds = array<i64: 16, 13>}, {pipeline_mode = #tpu.pipeline_mode<synchronous>, transform_indices = @transform_7, window_bounds = array<i64: 16, 11>}, {pipeline_mode = #tpu.pipeline_mode<synchronous>, transform_indices = @transform_8, window_bounds = array<i64: 16, 11>}, {pipeline_mode = #tpu.pipeline_mode<synchronous>, transform_indices = @transform_9, window_bounds = array<i64: 16, 7>}, {pipeline_mode = #tpu.pipeline_mode<synchronous>, transform_indices = @transform_10, window_bounds = array<i64: 16, 7>}, {transform_indices = @transform_11, window_bounds = array<i64: 1, 8, 16, 16>}]} {
    %c0 = arith.constant 0 : index
    %c0_0 = arith.constant 0 : index
    %c0_1 = arith.constant 0 : index
    %c0_2 = arith.constant 0 : index
    %0 = vector.load %arg1[%c0, %c0_0, %c0_1, %c0_2] : memref<1x4x16x16xf32, #tpu.memory_space<vmem>>, vector<1x4x16x16xf32>
    %c0_3 = arith.constant 0 : index
    %c4 = arith.constant 4 : index
    %c0_4 = arith.constant 0 : index
    %c0_5 = arith.constant 0 : index
    %1 = vector.load %arg12[%c0_3, %c4, %c0_4, %c0_5] : memref<1x8x16x16xf32, #tpu.memory_space<vmem>>, vector<1x4x16x16xf32>
    tpu.vector_store %arg12[%c0_3, %c4, %c0_4, %c0_5], %0 {strides = array<i32>} : memref<1x8x16x16xf32, #tpu.memory_space<vmem>>, vector<1x4x16x16xf32>,
    %cst = arith.constant 0.000000e+00 : f32
    %2 = vector.broadcast %cst : f32 to vector<1x15x15xf32>
    %c0_6 = arith.constant 0 : index
    %c0_7 = arith.constant 0 : index
    %c0_8 = arith.constant 0 : index
    %c0_9 = arith.constant 0 : index
    %3 = vector.load %arg1[%c0_6, %c0_7, %c0_8, %c0_9] : memref<1x4x16x16xf32, #tpu.memory_space<vmem>>, vector<1x4x16x16xf32>
    %4 = vector.extract_strided_slice %3 {offsets = [0, 0, 0, 0], sizes = [1, 4, 15, 16], strides = [1, 1, 1, 1]} : vector<1x4x16x16xf32> to vector<1x4x15x16xf32>
    %5 = vector.extract_strided_slice %3 {offsets = [0, 0, 1, 0], sizes = [1, 4, 15, 16], strides = [1, 1, 1, 1]} : vector<1x4x16x16xf32> to vector<1x4x15x16xf32>
    %6 = arith.maximumf %4, %5 : vector<1x4x15x16xf32>
    %7 = vector.extract_strided_slice %6 {offsets = [0, 0, 0, 0], sizes = [1, 4, 15, 15], strides = [1, 1, 1, 1]} : vector<1x4x15x16xf32> to vector<1x4x15x15xf32>
    %8 = vector.extract_strided_slice %6 {offsets = [0, 0, 0, 1], sizes = [1, 4, 15, 15], strides = [1, 1, 1, 1]} : vector<1x4x15x16xf32> to vector<1x4x15x15xf32>
    %9 = arith.maximumf %7, %8 : vector<1x4x15x15xf32>
    %c0_10 = arith.constant 0 : index
    %c0_11 = arith.constant 0 : index
    %c0_12 = arith.constant 0 : index
    %10 = vector.load %arg2[%c0_10, %c0_11, %c0_12] : memref<4x1x1xf32, #tpu.memory_space<vmem>>, vector<4x1x1xf32>
    %11 = vector.shape_cast %10 : vector<4x1x1xf32> to vector<1x4x1x1xf32>
    %12 = vector.broadcast %11 : vector<1x4x1x1xf32> to vector<1x4x15x15xf32>
    %13 = arith.mulf %12, %9 : vector<1x4x15x15xf32>
    %cst_13 = arith.constant dense<0.000000e+00> : vector<1x15x15xf32>
    %14 = vector.multi_reduction <add>, %13, %cst_13 [1] : vector<1x4x15x15xf32> to vector<1x15x15xf32>
    %15 = arith.addf %2, %14 : vector<1x15x15xf32>
    %c0_14 = arith.constant 0 : index
    %c0_15 = arith.constant 0 : index
    %16 = vector.load %arg3[%c0_14, %c0_15] : memref<1x1xf32, #tpu.memory_space<vmem>>, vector<1x1xf32>
    %17 = vector.shape_cast %16 : vector<1x1xf32> to vector<1x1x1xf32>
    %18 = vector.broadcast %17 : vector<1x1x1xf32> to vector<1x15x15xf32>
    %19 = arith.addf %15, %18 : vector<1x15x15xf32>
    %c0_16 = arith.constant 0 : index
    %c0_17 = arith.constant 0 : index
    %20 = vector.load %arg5[%c0_16, %c0_17] : memref<16x15xf32, #tpu.memory_space<vmem>>, vector<16x15xf32>
    %21 = vector.shape_cast %20 : vector<16x15xf32> to vector<1x16x15xf32>
    "tpu.trace_start"() <{level = 10 : i32, message = "bmn,bwn->bmw"}> : () -> ()
    %cst_18 = arith.constant dense<0.000000e+00> : vector<1x15x16xf32>
    %22 = tpu.matmul %19, %21, %cst_18 {dimension_numbers = #tpu.dot_dimension_numbers<[2], [2], [1], [1], [0, 0, 0, 1, 1, 1], [0], [0]>} : vector<1x15x15xf32>, vector<1x16x15xf32>, vector<1x15x16xf32> -> vector<1x15x16xf32>
    "tpu.trace_stop"() : () -> ()
    %c0_19 = arith.constant 0 : index
    %c0_20 = arith.constant 0 : index
    %23 = vector.load %arg4[%c0_19, %c0_20] : memref<16x15xf32, #tpu.memory_space<vmem>>, vector<16x15xf32>
    %24 = vector.shape_cast %23 : vector<16x15xf32> to vector<1x16x15xf32>
    "tpu.trace_start"() <{level = 10 : i32, message = "bhm,bmw->bhw"}> : () -> ()
    %cst_21 = arith.constant dense<0.000000e+00> : vector<1x16x16xf32>
    %25 = tpu.matmul %24, %22, %cst_21 {dimension_numbers = #tpu.dot_dimension_numbers<[2], [1], [1], [2], [0, 0, 0, 1, 1, 2], [0], [0]>} : vector<1x16x15xf32>, vector<1x15x16xf32>, vector<1x16x16xf32> -> vector<1x16x16xf32>
    "tpu.trace_stop"() : () -> ()
    %c0_22 = arith.constant 0 : index
    %c0_23 = arith.constant 0 : index
    %c0_24 = arith.constant 0 : index
    %c0_25 = arith.constant 0 : index
    %26 = vector.load %arg12[%c0_22, %c0_23, %c0_24, %c0_25] : memref<1x8x16x16xf32, #tpu.memory_space<vmem>>, vector<1x1x16x16xf32>
    %27 = vector.shape_cast %26 : vector<1x1x16x16xf32> to vector<1x16x16xf32>
    %28 = vector.shape_cast %25 : vector<1x16x16xf32> to vector<1x1x16x16xf32>
    tpu.vector_store %arg12[%c0_22, %c0_23, %c0_24, %c0_25], %28 {strides = array<i32>} : memref<1x8x16x16xf32, #tpu.memory_space<vmem>>, vector<1x1x16x16xf32>,
    %cst_26 = arith.constant 0.000000e+00 : f32
    %29 = vector.broadcast %cst_26 : f32 to vector<1x13x13xf32>
    %c0_27 = arith.constant 0 : index
    %c0_28 = arith.constant 0 : index
    %c0_29 = arith.constant 0 : index
    %c0_30 = arith.constant 0 : index
    %30 = vector.load %arg1[%c0_27, %c0_28, %c0_29, %c0_30] : memref<1x4x16x16xf32, #tpu.memory_space<vmem>>, vector<1x4x16x16xf32>
    %31 = vector.extract_strided_slice %30 {offsets = [0, 0, 0, 0], sizes = [1, 4, 13, 16], strides = [1, 1, 1, 1]} : vector<1x4x16x16xf32> to vector<1x4x13x16xf32>
    %32 = vector.extract_strided_slice %30 {offsets = [0, 0, 1, 0], sizes = [1, 4, 13, 16], strides = [1, 1, 1, 1]} : vector<1x4x16x16xf32> to vector<1x4x13x16xf32>
    %33 = arith.maximumf %31, %32 : vector<1x4x13x16xf32>
    %34 = vector.extract_strided_slice %30 {offsets = [0, 0, 2, 0], sizes = [1, 4, 13, 16], strides = [1, 1, 1, 1]} : vector<1x4x16x16xf32> to vector<1x4x13x16xf32>
    %35 = arith.maximumf %33, %34 : vector<1x4x13x16xf32>
    %36 = vector.extract_strided_slice %35 {offsets = [0, 0, 0, 0], sizes = [1, 4, 13, 13], strides = [1, 1, 1, 1]} : vector<1x4x13x16xf32> to vector<1x4x13x13xf32>
    %37 = vector.extract_strided_slice %35 {offsets = [0, 0, 0, 1], sizes = [1, 4, 13, 13], strides = [1, 1, 1, 1]} : vector<1x4x13x16xf32> to vector<1x4x13x13xf32>
    %38 = arith.maximumf %36, %37 : vector<1x4x13x13xf32>
    %39 = vector.extract_strided_slice %35 {offsets = [0, 0, 0, 2], sizes = [1, 4, 13, 13], strides = [1, 1, 1, 1]} : vector<1x4x13x16xf32> to vector<1x4x13x13xf32>
    %40 = arith.maximumf %38, %39 : vector<1x4x13x13xf32>
    %c0_31 = arith.constant 0 : index
    %c0_32 = arith.constant 0 : index
    %c0_33 = arith.constant 0 : index
    %41 = vector.load %arg2[%c0_31, %c0_32, %c0_33] : memref<4x1x1xf32, #tpu.memory_space<vmem>>, vector<4x1x1xf32>
    %42 = vector.shape_cast %41 : vector<4x1x1xf32> to vector<1x4x1x1xf32>
    %43 = vector.broadcast %42 : vector<1x4x1x1xf32> to vector<1x4x13x13xf32>
    %44 = arith.mulf %43, %40 : vector<1x4x13x13xf32>
    %cst_34 = arith.constant dense<0.000000e+00> : vector<1x13x13xf32>
    %45 = vector.multi_reduction <add>, %44, %cst_34 [1] : vector<1x4x13x13xf32> to vector<1x13x13xf32>
    %46 = arith.addf %29, %45 : vector<1x13x13xf32>
    %c0_35 = arith.constant 0 : index
    %c0_36 = arith.constant 0 : index
    %47 = vector.load %arg3[%c0_35, %c0_36] : memref<1x1xf32, #tpu.memory_space<vmem>>, vector<1x1xf32>
    %48 = vector.shape_cast %47 : vector<1x1xf32> to vector<1x1x1xf32>
    %49 = vector.broadcast %48 : vector<1x1x1xf32> to vector<1x13x13xf32>
    %50 = arith.addf %46, %49 : vector<1x13x13xf32>
    %c0_37 = arith.constant 0 : index
    %c0_38 = arith.constant 0 : index
    %51 = vector.load %arg7[%c0_37, %c0_38] : memref<16x13xf32, #tpu.memory_space<vmem>>, vector<16x13xf32>
    %52 = vector.shape_cast %51 : vector<16x13xf32> to vector<1x16x13xf32>
    "tpu.trace_start"() <{level = 10 : i32, message = "bmn,bwn->bmw"}> : () -> ()
    %cst_39 = arith.constant dense<0.000000e+00> : vector<1x13x16xf32>
    %53 = tpu.matmul %50, %52, %cst_39 {dimension_numbers = #tpu.dot_dimension_numbers<[2], [2], [1], [1], [0, 0, 0, 1, 1, 1], [0], [0]>} : vector<1x13x13xf32>, vector<1x16x13xf32>, vector<1x13x16xf32> -> vector<1x13x16xf32>
    "tpu.trace_stop"() : () -> ()
    %c0_40 = arith.constant 0 : index
    %c0_41 = arith.constant 0 : index
    %54 = vector.load %arg6[%c0_40, %c0_41] : memref<16x13xf32, #tpu.memory_space<vmem>>, vector<16x13xf32>
    %55 = vector.shape_cast %54 : vector<16x13xf32> to vector<1x16x13xf32>
    "tpu.trace_start"() <{level = 10 : i32, message = "bhm,bmw->bhw"}> : () -> ()
    %cst_42 = arith.constant dense<0.000000e+00> : vector<1x16x16xf32>
    %56 = tpu.matmul %55, %53, %cst_42 {dimension_numbers = #tpu.dot_dimension_numbers<[2], [1], [1], [2], [0, 0, 0, 1, 1, 2], [0], [0]>} : vector<1x16x13xf32>, vector<1x13x16xf32>, vector<1x16x16xf32> -> vector<1x16x16xf32>
    "tpu.trace_stop"() : () -> ()
    %c0_43 = arith.constant 0 : index
    %c1 = arith.constant 1 : index
    %c0_44 = arith.constant 0 : index
    %c0_45 = arith.constant 0 : index
    %57 = vector.load %arg12[%c0_43, %c1, %c0_44, %c0_45] : memref<1x8x16x16xf32, #tpu.memory_space<vmem>>, vector<1x1x16x16xf32>
    %58 = vector.shape_cast %57 : vector<1x1x16x16xf32> to vector<1x16x16xf32>
    %59 = vector.shape_cast %56 : vector<1x16x16xf32> to vector<1x1x16x16xf32>
    tpu.vector_store %arg12[%c0_43, %c1, %c0_44, %c0_45], %59 {strides = array<i32>} : memref<1x8x16x16xf32, #tpu.memory_space<vmem>>, vector<1x1x16x16xf32>,
    %cst_46 = arith.constant 0.000000e+00 : f32
    %60 = vector.broadcast %cst_46 : f32 to vector<1x11x11xf32>
    %c0_47 = arith.constant 0 : index
    %c0_48 = arith.constant 0 : index
    %c0_49 = arith.constant 0 : index
    %c0_50 = arith.constant 0 : index
    %61 = vector.load %arg1[%c0_47, %c0_48, %c0_49, %c0_50] : memref<1x4x16x16xf32, #tpu.memory_space<vmem>>, vector<1x4x16x16xf32>
    %62 = vector.extract_strided_slice %61 {offsets = [0, 0, 0, 0], sizes = [1, 4, 11, 16], strides = [1, 1, 1, 1]} : vector<1x4x16x16xf32> to vector<1x4x11x16xf32>
    %63 = vector.extract_strided_slice %61 {offsets = [0, 0, 1, 0], sizes = [1, 4, 11, 16], strides = [1, 1, 1, 1]} : vector<1x4x16x16xf32> to vector<1x4x11x16xf32>
    %64 = arith.maximumf %62, %63 : vector<1x4x11x16xf32>
    %65 = vector.extract_strided_slice %61 {offsets = [0, 0, 2, 0], sizes = [1, 4, 11, 16], strides = [1, 1, 1, 1]} : vector<1x4x16x16xf32> to vector<1x4x11x16xf32>
    %66 = arith.maximumf %64, %65 : vector<1x4x11x16xf32>
    %67 = vector.extract_strided_slice %61 {offsets = [0, 0, 3, 0], sizes = [1, 4, 11, 16], strides = [1, 1, 1, 1]} : vector<1x4x16x16xf32> to vector<1x4x11x16xf32>
    %68 = arith.maximumf %66, %67 : vector<1x4x11x16xf32>
    %69 = vector.extract_strided_slice %61 {offsets = [0, 0, 4, 0], sizes = [1, 4, 11, 16], strides = [1, 1, 1, 1]} : vector<1x4x16x16xf32> to vector<1x4x11x16xf32>
    %70 = arith.maximumf %68, %69 : vector<1x4x11x16xf32>
    %71 = vector.extract_strided_slice %70 {offsets = [0, 0, 0, 0], sizes = [1, 4, 11, 11], strides = [1, 1, 1, 1]} : vector<1x4x11x16xf32> to vector<1x4x11x11xf32>
    %72 = vector.extract_strided_slice %70 {offsets = [0, 0, 0, 1], sizes = [1, 4, 11, 11], strides = [1, 1, 1, 1]} : vector<1x4x11x16xf32> to vector<1x4x11x11xf32>
    %73 = arith.maximumf %71, %72 : vector<1x4x11x11xf32>
    %74 = vector.extract_strided_slice %70 {offsets = [0, 0, 0, 2], sizes = [1, 4, 11, 11], strides = [1, 1, 1, 1]} : vector<1x4x11x16xf32> to vector<1x4x11x11xf32>
    %75 = arith.maximumf %73, %74 : vector<1x4x11x11xf32>
    %76 = vector.extract_strided_slice %70 {offsets = [0, 0, 0, 3], sizes = [1, 4, 11, 11], strides = [1, 1, 1, 1]} : vector<1x4x11x16xf32> to vector<1x4x11x11xf32>
    %77 = arith.maximumf %75, %76 : vector<1x4x11x11xf32>
    %78 = vector.extract_strided_slice %70 {offsets = [0, 0, 0, 4], sizes = [1, 4, 11, 11], strides = [1, 1, 1, 1]} : vector<1x4x11x16xf32> to vector<1x4x11x11xf32>
    %79 = arith.maximumf %77, %78 : vector<1x4x11x11xf32>
    %c0_51 = arith.constant 0 : index
    %c0_52 = arith.constant 0 : index
    %c0_53 = arith.constant 0 : index
    %80 = vector.load %arg2[%c0_51, %c0_52, %c0_53] : memref<4x1x1xf32, #tpu.memory_space<vmem>>, vector<4x1x1xf32>
    %81 = vector.shape_cast %80 : vector<4x1x1xf32> to vector<1x4x1x1xf32>
    %82 = vector.broadcast %81 : vector<1x4x1x1xf32> to vector<1x4x11x11xf32>
    %83 = arith.mulf %82, %79 : vector<1x4x11x11xf32>
    %cst_54 = arith.constant dense<0.000000e+00> : vector<1x11x11xf32>
    %84 = vector.multi_reduction <add>, %83, %cst_54 [1] : vector<1x4x11x11xf32> to vector<1x11x11xf32>
    %85 = arith.addf %60, %84 : vector<1x11x11xf32>
    %c0_55 = arith.constant 0 : index
    %c0_56 = arith.constant 0 : index
    %86 = vector.load %arg3[%c0_55, %c0_56] : memref<1x1xf32, #tpu.memory_space<vmem>>, vector<1x1xf32>
    %87 = vector.shape_cast %86 : vector<1x1xf32> to vector<1x1x1xf32>
    %88 = vector.broadcast %87 : vector<1x1x1xf32> to vector<1x11x11xf32>
    %89 = arith.addf %85, %88 : vector<1x11x11xf32>
    %c0_57 = arith.constant 0 : index
    %c0_58 = arith.constant 0 : index
    %90 = vector.load %arg9[%c0_57, %c0_58] : memref<16x11xf32, #tpu.memory_space<vmem>>, vector<16x11xf32>
    %91 = vector.shape_cast %90 : vector<16x11xf32> to vector<1x16x11xf32>
    "tpu.trace_start"() <{level = 10 : i32, message = "bmn,bwn->bmw"}> : () -> ()
    %cst_59 = arith.constant dense<0.000000e+00> : vector<1x11x16xf32>
    %92 = tpu.matmul %89, %91, %cst_59 {dimension_numbers = #tpu.dot_dimension_numbers<[2], [2], [1], [1], [0, 0, 0, 1, 1, 1], [0], [0]>} : vector<1x11x11xf32>, vector<1x16x11xf32>, vector<1x11x16xf32> -> vector<1x11x16xf32>
    "tpu.trace_stop"() : () -> ()
    %c0_60 = arith.constant 0 : index
    %c0_61 = arith.constant 0 : index
    %93 = vector.load %arg8[%c0_60, %c0_61] : memref<16x11xf32, #tpu.memory_space<vmem>>, vector<16x11xf32>
    %94 = vector.shape_cast %93 : vector<16x11xf32> to vector<1x16x11xf32>
    "tpu.trace_start"() <{level = 10 : i32, message = "bhm,bmw->bhw"}> : () -> ()
    %cst_62 = arith.constant dense<0.000000e+00> : vector<1x16x16xf32>
    %95 = tpu.matmul %94, %92, %cst_62 {dimension_numbers = #tpu.dot_dimension_numbers<[2], [1], [1], [2], [0, 0, 0, 1, 1, 2], [0], [0]>} : vector<1x16x11xf32>, vector<1x11x16xf32>, vector<1x16x16xf32> -> vector<1x16x16xf32>
    "tpu.trace_stop"() : () -> ()
    %c0_63 = arith.constant 0 : index
    %c2 = arith.constant 2 : index
    %c0_64 = arith.constant 0 : index
    %c0_65 = arith.constant 0 : index
    %96 = vector.load %arg12[%c0_63, %c2, %c0_64, %c0_65] : memref<1x8x16x16xf32, #tpu.memory_space<vmem>>, vector<1x1x16x16xf32>
    %97 = vector.shape_cast %96 : vector<1x1x16x16xf32> to vector<1x16x16xf32>
    %98 = vector.shape_cast %95 : vector<1x16x16xf32> to vector<1x1x16x16xf32>
    tpu.vector_store %arg12[%c0_63, %c2, %c0_64, %c0_65], %98 {strides = array<i32>} : memref<1x8x16x16xf32, #tpu.memory_space<vmem>>, vector<1x1x16x16xf32>,
    %cst_66 = arith.constant 0.000000e+00 : f32
    %99 = vector.broadcast %cst_66 : f32 to vector<1x7x7xf32>
    %c0_67 = arith.constant 0 : index
    %c0_68 = arith.constant 0 : index
    %c0_69 = arith.constant 0 : index
    %c0_70 = arith.constant 0 : index
    %100 = vector.load %arg1[%c0_67, %c0_68, %c0_69, %c0_70] : memref<1x4x16x16xf32, #tpu.memory_space<vmem>>, vector<1x4x16x16xf32>
    %101 = vector.extract_strided_slice %100 {offsets = [0, 0, 0, 0], sizes = [1, 4, 7, 16], strides = [1, 1, 1, 1]} : vector<1x4x16x16xf32> to vector<1x4x7x16xf32>
    %102 = vector.extract_strided_slice %100 {offsets = [0, 0, 1, 0], sizes = [1, 4, 7, 16], strides = [1, 1, 1, 1]} : vector<1x4x16x16xf32> to vector<1x4x7x16xf32>
    %103 = arith.maximumf %101, %102 : vector<1x4x7x16xf32>
    %104 = vector.extract_strided_slice %100 {offsets = [0, 0, 2, 0], sizes = [1, 4, 7, 16], strides = [1, 1, 1, 1]} : vector<1x4x16x16xf32> to vector<1x4x7x16xf32>
    %105 = arith.maximumf %103, %104 : vector<1x4x7x16xf32>
    %106 = vector.extract_strided_slice %100 {offsets = [0, 0, 3, 0], sizes = [1, 4, 7, 16], strides = [1, 1, 1, 1]} : vector<1x4x16x16xf32> to vector<1x4x7x16xf32>
    %107 = arith.maximumf %105, %106 : vector<1x4x7x16xf32>
    %108 = vector.extract_strided_slice %100 {offsets = [0, 0, 4, 0], sizes = [1, 4, 7, 16], strides = [1, 1, 1, 1]} : vector<1x4x16x16xf32> to vector<1x4x7x16xf32>
    %109 = arith.maximumf %107, %108 : vector<1x4x7x16xf32>
    %110 = vector.extract_strided_slice %100 {offsets = [0, 0, 5, 0], sizes = [1, 4, 7, 16], strides = [1, 1, 1, 1]} : vector<1x4x16x16xf32> to vector<1x4x7x16xf32>
    %111 = arith.maximumf %109, %110 : vector<1x4x7x16xf32>
    %112 = vector.extract_strided_slice %111 {offsets = [0, 0, 0, 0], sizes = [1, 4, 7, 7], strides = [1, 1, 1, 1]} : vector<1x4x7x16xf32> to vector<1x4x7x7xf32>
    %113 = vector.extract_strided_slice %111 {offsets = [0, 0, 0, 1], sizes = [1, 4, 7, 7], strides = [1, 1, 1, 1]} : vector<1x4x7x16xf32> to vector<1x4x7x7xf32>
    %114 = arith.maximumf %112, %113 : vector<1x4x7x7xf32>
    %115 = vector.extract_strided_slice %111 {offsets = [0, 0, 0, 2], sizes = [1, 4, 7, 7], strides = [1, 1, 1, 1]} : vector<1x4x7x16xf32> to vector<1x4x7x7xf32>
    %116 = arith.maximumf %114, %115 : vector<1x4x7x7xf32>
    %117 = vector.extract_strided_slice %111 {offsets = [0, 0, 0, 3], sizes = [1, 4, 7, 7], strides = [1, 1, 1, 1]} : vector<1x4x7x16xf32> to vector<1x4x7x7xf32>
    %118 = arith.maximumf %116, %117 : vector<1x4x7x7xf32>
    %119 = vector.extract_strided_slice %111 {offsets = [0, 0, 0, 4], sizes = [1, 4, 7, 7], strides = [1, 1, 1, 1]} : vector<1x4x7x16xf32> to vector<1x4x7x7xf32>
    %120 = arith.maximumf %118, %119 : vector<1x4x7x7xf32>
    %121 = vector.extract_strided_slice %111 {offsets = [0, 0, 0, 5], sizes = [1, 4, 7, 7], strides = [1, 1, 1, 1]} : vector<1x4x7x16xf32> to vector<1x4x7x7xf32>
    %122 = arith.maximumf %120, %121 : vector<1x4x7x7xf32>
    %c0_71 = arith.constant 0 : index
    %c0_72 = arith.constant 0 : index
    %c0_73 = arith.constant 0 : index
    %123 = vector.load %arg2[%c0_71, %c0_72, %c0_73] : memref<4x1x1xf32, #tpu.memory_space<vmem>>, vector<4x1x1xf32>
    %124 = vector.shape_cast %123 : vector<4x1x1xf32> to vector<1x4x1x1xf32>
    %125 = vector.broadcast %124 : vector<1x4x1x1xf32> to vector<1x4x7x7xf32>
    %126 = arith.mulf %125, %122 : vector<1x4x7x7xf32>
    %cst_74 = arith.constant dense<0.000000e+00> : vector<1x7x7xf32>
    %127 = vector.multi_reduction <add>, %126, %cst_74 [1] : vector<1x4x7x7xf32> to vector<1x7x7xf32>
    %128 = arith.addf %99, %127 : vector<1x7x7xf32>
    %c0_75 = arith.constant 0 : index
    %c0_76 = arith.constant 0 : index
    %129 = vector.load %arg3[%c0_75, %c0_76] : memref<1x1xf32, #tpu.memory_space<vmem>>, vector<1x1xf32>
    %130 = vector.shape_cast %129 : vector<1x1xf32> to vector<1x1x1xf32>
    %131 = vector.broadcast %130 : vector<1x1x1xf32> to vector<1x7x7xf32>
    %132 = arith.addf %128, %131 : vector<1x7x7xf32>
    %c0_77 = arith.constant 0 : index
    %c0_78 = arith.constant 0 : index
    %133 = vector.load %arg11[%c0_77, %c0_78] : memref<16x7xf32, #tpu.memory_space<vmem>>, vector<16x7xf32>
    %134 = vector.shape_cast %133 : vector<16x7xf32> to vector<1x16x7xf32>
    "tpu.trace_start"() <{level = 10 : i32, message = "bmn,bwn->bmw"}> : () -> ()
    %cst_79 = arith.constant dense<0.000000e+00> : vector<1x7x16xf32>
    %135 = tpu.matmul %132, %134, %cst_79 {dimension_numbers = #tpu.dot_dimension_numbers<[2], [2], [1], [1], [0, 0, 0, 1, 1, 1], [0], [0]>} : vector<1x7x7xf32>, vector<1x16x7xf32>, vector<1x7x16xf32> -> vector<1x7x16xf32>
    "tpu.trace_stop"() : () -> ()
    %c0_80 = arith.constant 0 : index
    %c0_81 = arith.constant 0 : index
    %136 = vector.load %arg10[%c0_80, %c0_81] : memref<16x7xf32, #tpu.memory_space<vmem>>, vector<16x7xf32>
    %137 = vector.shape_cast %136 : vector<16x7xf32> to vector<1x16x7xf32>
    "tpu.trace_start"() <{level = 10 : i32, message = "bhm,bmw->bhw"}> : () -> ()
    %cst_82 = arith.constant dense<0.000000e+00> : vector<1x16x16xf32>
    %138 = tpu.matmul %137, %135, %cst_82 {dimension_numbers = #tpu.dot_dimension_numbers<[2], [1], [1], [2], [0, 0, 0, 1, 1, 2], [0], [0]>} : vector<1x16x7xf32>, vector<1x7x16xf32>, vector<1x16x16xf32> -> vector<1x16x16xf32>
    "tpu.trace_stop"() : () -> ()
    %c0_83 = arith.constant 0 : index
    %c3 = arith.constant 3 : index
    %c0_84 = arith.constant 0 : index
    %c0_85 = arith.constant 0 : index
    %139 = vector.load %arg12[%c0_83, %c3, %c0_84, %c0_85] : memref<1x8x16x16xf32, #tpu.memory_space<vmem>>, vector<1x1x16x16xf32>
    %140 = vector.shape_cast %139 : vector<1x1x16x16xf32> to vector<1x16x16xf32>
    %141 = vector.shape_cast %138 : vector<1x16x16xf32> to vector<1x1x16x16xf32>
    tpu.vector_store %arg12[%c0_83, %c3, %c0_84, %c0_85], %141 {strides = array<i32>} : memref<1x8x16x16xf32, #tpu.memory_space<vmem>>, vector<1x1x16x16xf32>,
    return
  }
  func.func @transform_0(%arg0: i32) -> (i32, i32, i32, i32) {
    %c0_i32 = arith.constant 0 : i32
    %c0_i32_0 = arith.constant 0 : i32
    %c0_i32_1 = arith.constant 0 : i32
    %c0_i32_2 = arith.constant 0 : i32
    return %arg0, %c0_i32, %c0_i32_0, %c0_i32_1 : i32, i32, i32, i32
  }
  func.func @transform_1(%arg0: i32) -> (i32, i32, i32) {
    %c0_i32 = arith.constant 0 : i32
    %c0_i32_0 = arith.constant 0 : i32
    %c0_i32_1 = arith.constant 0 : i32
    %c0_i32_2 = arith.constant 0 : i32
    return %c0_i32, %c0_i32_0, %c0_i32_1 : i32, i32, i32
  }
  func.func @transform_2(%arg0: i32) -> (i32, i32) {
    %c0_i32 = arith.constant 0 : i32
    %c0_i32_0 = arith.constant 0 : i32
    %c0_i32_1 = arith.constant 0 : i32
    return %c0_i32, %c0_i32_0 : i32, i32
  }
  func.func @transform_3(%arg0: i32) -> (i32, i32) {
    %c0_i32 = arith.constant 0 : i32
    %c0_i32_0 = arith.constant 0 : i32
    %c0_i32_1 = arith.constant 0 : i32
    return %c0_i32, %c0_i32_0 : i32, i32
  }
  func.func @transform_4(%arg0: i32) -> (i32, i32) {
    %c0_i32 = arith.constant 0 : i32
    %c0_i32_0 = arith.constant 0 : i32
    %c0_i32_1 = arith.constant 0 : i32
    return %c0_i32, %c0_i32_0 : i32, i32
  }
  func.func @transform_5(%arg0: i32) -> (i32, i32) {
    %c0_i32 = arith.constant 0 : i32
    %c0_i32_0 = arith.constant 0 : i32
    %c0_i32_1 = arith.constant 0 : i32
    return %c0_i32, %c0_i32_0 : i32, i32
  }
  func.func @transform_6(%arg0: i32) -> (i32, i32) {
    %c0_i32 = arith.constant 0 : i32
    %c0_i32_0 = arith.constant 0 : i32
    %c0_i32_1 = arith.constant 0 : i32
    return %c0_i32, %c0_i32_0 : i32, i32
  }
  func.func @transform_7(%arg0: i32) -> (i32, i32) {
    %c0_i32 = arith.constant 0 : i32
    %c0_i32_0 = arith.constant 0 : i32
    %c0_i32_1 = arith.constant 0 : i32
    return %c0_i32, %c0_i32_0 : i32, i32
  }
  func.func @transform_8(%arg0: i32) -> (i32, i32) {
    %c0_i32 = arith.constant 0 : i32
    %c0_i32_0 = arith.constant 0 : i32
    %c0_i32_1 = arith.constant 0 : i32
    return %c0_i32, %c0_i32_0 : i32, i32
  }
  func.func @transform_9(%arg0: i32) -> (i32, i32) {
    %c0_i32 = arith.constant 0 : i32
    %c0_i32_0 = arith.constant 0 : i32
    %c0_i32_1 = arith.constant 0 : i32
    return %c0_i32, %c0_i32_0 : i32, i32
  }
  func.func @transform_10(%arg0: i32) -> (i32, i32) {
    %c0_i32 = arith.constant 0 : i32
    %c0_i32_0 = arith.constant 0 : i32
    %c0_i32_1 = arith.constant 0 : i32
    return %c0_i32, %c0_i32_0 : i32, i32
  }
  func.func @transform_11(%arg0: i32) -> (i32, i32, i32, i32) {
    %c0_i32 = arith.constant 0 : i32
    %c0_i32_0 = arith.constant 0 : i32
    %c0_i32_1 = arith.constant 0 : i32
    %c0_i32_2 = arith.constant 0 : i32
    return %arg0, %c0_i32, %c0_i32_0, %c0_i32_1 : i32, i32, i32, i32
  }
}

</mosaic_0001>

<llo_original>
// kernel: tpu_custom_call.1
$region0: #{tpu_custom_call.1}
  #allocation0 [shape = 'u32[]', space=smem, size = 0x4, offset = 0x4, fixed_abs, tag = 'smem constant byte address 0x4 - core index']
  #allocation1 [shape = 'u32[72,128]{1,0:T(1,128)}', space=vmem, size = 0x9000, scoped, tag = 'internal scratch']
  #allocation2 [shape = 'f32[1,1]{1,0:T(1,128)S(1)}', space=vmem, size = 0x200, scoped, tag = 'scoped memory for tpu_custom_call.1']
  %s0 = inlined_call_operand.hbm [shape: f32[2,4,16,16], index: 0, kind: input, shape index: {}]
  %s1 = inlined_call_operand.vmem [shape: f32[4,1,1], index: 1, kind: input, shape index: {}]
  %s2 = inlined_call_operand.<no memory space> [shape: f32[1,1], index: 2, kind: input, shape index: {}]
  %s3 = inlined_call_operand.vmem [shape: f32[16,15], index: 3, kind: input, shape index: {}]
  %s4 = inlined_call_operand.vmem [shape: f32[16,15], index: 4, kind: input, shape index: {}]
  %s5 = inlined_call_operand.hbm [shape: f32[16,13], index: 5, kind: input, shape index: {}]
  %s6 = inlined_call_operand.hbm [shape: f32[16,13], index: 6, kind: input, shape index: {}]
  %s7 = inlined_call_operand.hbm [shape: f32[16,11], index: 7, kind: input, shape index: {}]
  %s8 = inlined_call_operand.hbm [shape: f32[16,11], index: 8, kind: input, shape index: {}]
  %s9 = inlined_call_operand.vmem [shape: f32[16,7], index: 9, kind: input, shape index: {}]
  %s10 = inlined_call_operand.vmem [shape: f32[16,7], index: 10, kind: input, shape index: {}]
  %s11 = inlined_call_operand.hbm [shape: f32[2,8,16,16], index: 11, kind: output, shape index: {}]
  %s12 = sld [smem:[#allocation0]]
  $region97: #{tpu_custom_call.1} parent=0
    _
  %s14 = ssub.s32 1, %s12
  %s15 = scalar_select 0, %s14, %s12
  %v16 = vstv %s2
  %17 = vst [vmem:[#allocation2] sm:$0x1] %v16
  $region1: #{tpu_custom_call.1} parent=0
    #allocation3 [shape = 'u8[65536]{0}', space=vmem, size = 0x10000, scoped, tag = 'input window, operand 0']
    #allocation4 [shape = 's32[2]{0}', space=sflag, size = 0x8, scoped, tag = 'scoped memory for tpu_custom_call.1']
    #allocation5 [shape = 's32[2]{0}', space=sflag, size = 0x8, scoped, tag = 'scoped memory for tpu_custom_call.1']
    #allocation6 [shape = 'u8[8192]{0}', space=vmem, size = 0x2000, scoped, tag = 'input window, operand 5, single buffered']
    #allocation7 [shape = 's32[1]{0}', space=sflag, size = 0x4, scoped, tag = 'scoped memory for tpu_custom_call.1']
    #allocation8 [shape = 'u8[8192]{0}', space=vmem, size = 0x2000, scoped, tag = 'input window, operand 6, single buffered']
    #allocation9 [shape = 'u8[8192]{0}', space=vmem, size = 0x2000, scoped, tag = 'input window, operand 7, single buffered']
    #allocation10 [shape = 's32[1]{0}', space=sflag, size = 0x4, scoped, tag = 'scoped memory for tpu_custom_call.1']
    #allocation11 [shape = 'u8[8192]{0}', space=vmem, size = 0x2000, scoped, tag = 'input window, operand 8, single buffered']
    #allocation12 [shape = 'u8[131072]{0}', space=vmem, size = 0x20000, scoped, tag = 'output window, operand 0']
    %18 = vsyncpa [#allocation4], 0
    %s19 = scalar_lea.sflag [#allocation4], 1
    %20 = vsyncpa %s19, 0
    %21 = vsyncpa [#allocation7], 0
    %22 = vsyncpa [#allocation10], 0
    %23 = vsyncpa [#allocation5], 0
    %s24 = scalar_lea.sflag [#allocation5], 1
    %25 = vsyncpa %s24, 0
    loop: start=0, step=1, limit=4
    $region2: #{tpu_custom_call.1} parent=1 // loop_pre_header
      _
    $region3: #{tpu_custom_call.1} parent=1 // loop_header
      %s27 = sphi 0, %s31
      %p28 = scmp.ge.s32.totalorder %s27, 4
      %s37 = sphi 0, %s39
      %s40 = sphi 0, %s37
      %s41 = sphi 0, %s40
      %s57 = sphi 0, %s41
      %s61 = sphi 0, %s61
      %s63 = sphi 0, %s61
      %s64 = sphi 0, %s63
      %s78 = sphi 0, %s64
      %s82 = sphi 0, %s82
      %s84 = sphi 0, %s82
      %s85 = sphi 0, %s84
      %s99 = sphi 0, %s85
      %s103 = sphi 0, %s103
      %s105 = sphi 0, %s103
      %s106 = sphi 0, %s105
      %s120 = sphi 0, %s106
      %s124 = sphi 0, %s124
      %s126 = sphi 0, %s124
      %s127 = sphi 0, %s126
      %s141 = sphi 0, %s127
      %s145 = sphi 0, %s145
      %s147 = sphi 0, %s145
      %s148 = sphi 0, %s147
      %s162 = sphi 0, %s148
      %s166 = sphi 0, %s166
      %s168 = sphi 0, %s166
      %s169 = sphi 0, %s168
      %s183 = sphi 0, %s169
      %s187 = sphi 0, %s187
      %s189 = sphi 0, %s187
      %s190 = sphi 0, %s189
      %s204 = sphi 0, %s190
      %s208 = sphi 0, %s208
      %s210 = sphi 0, %s208
      %s211 = sphi 0, %s210
      %s225 = sphi 0, %s211
      %s229 = sphi 0, %s229
      %s231 = sphi 0, %s229
      %s232 = sphi 0, %s231
      %s246 = sphi 0, %s232
      %s250 = sphi 0, %s250
      %s252 = sphi 0, %s250
      %s253 = sphi 0, %s252
      %s267 = sphi 0, %s253
      %s273 = sphi 0, %s275
      %s276 = sphi 0, %s273
      %s277 = sphi 0, %s276
      %s293 = sphi 0, %s277
    $region4: #{tpu_custom_call.1} parent=1 // loop_header_branch
      %30 = sbr.rel (%p28) target = $region8
    $region5: #{tpu_custom_call.1} parent=1 // loop_body
      %s32 = ssub.s32 %s27, 1
      %s33 = ssub.s32 %s27, 2
      %s34 = sadd.s32 %s27, 1
      %s35 = ssub.s32 %s27, %s34
      %p36 = scmp.eq.s32.totalorder %s35, 0
      %s38 = sadd.s32 %s37, 1
      %s39 = scalar_select %p36, %s37, %s38
      %p42 = pneg %p36
      %p43 = scmp.eq.s32.totalorder %s27, 1
      %p44 = por %p42, %p43
      %p45 = scmp.ne.s32.totalorder %s37, %s40
      %p46 = scmp.eq.s32.totalorder %s27, 0
      %p47 = por %p45, %p46
      %p48 = scmp.ne.s32.totalorder %s37, %s40
      %p49 = scmp.eq.s32.totalorder %s32, 1
      %p50 = por %p48, %p49
      %p51 = scmp.ne.s32.totalorder %s40, %s41
      %p52 = scmp.eq.s32.totalorder %s32, 0
      %p53 = por %p51, %p52
      %p54 = scmp.ne.s32.totalorder %s40, %s41
      %p55 = scmp.eq.s32.totalorder %s33, 1
      %p56 = por %p54, %p55
      %p58 = scmp.ne.s32.totalorder %s41, %s57
      %p59 = scmp.eq.s32.totalorder %s33, 0
      %p60 = por %p58, %p59
      %s62 = sadd.s32 %s61, 1
      %p65 = scmp.eq.s32.totalorder %s27, 1
      %p66 = scmp.ne.s32.totalorder %s61, %s63
      %p67 = scmp.eq.s32.totalorder %s27, 0
      %p68 = por %p66, %p67
      %p69 = scmp.ne.s32.totalorder %s61, %s63
      %p70 = scmp.eq.s32.totalorder %s32, 1
      %p71 = por %p69, %p70
      %p72 = scmp.ne.s32.totalorder %s63, %s64
      %p73 = scmp.eq.s32.totalorder %s32, 0
      %p74 = por %p72, %p73
      %p75 = scmp.ne.s32.totalorder %s63, %s64
      %p76 = scmp.eq.s32.totalorder %s33, 1
      %p77 = por %p75, %p76
      %p79 = scmp.ne.s32.totalorder %s64, %s78
      %p80 = scmp.eq.s32.totalorder %s33, 0
      %p81 = por %p79, %p80
      %s83 = sadd.s32 %s82, 1
      %p86 = scmp.eq.s32.totalorder %s27, 1
      %p87 = scmp.ne.s32.totalorder %s82, %s84
      %p88 = scmp.eq.s32.totalorder %s27, 0
      %p89 = por %p87, %p88
      %p90 = scmp.ne.s32.totalorder %s82, %s84
      %p91 = scmp.eq.s32.totalorder %s32, 1
      %p92 = por %p90, %p91
      %p93 = scmp.ne.s32.totalorder %s84, %s85
      %p94 = scmp.eq.s32.totalorder %s32, 0
      %p95 = por %p93, %p94
      %p96 = scmp.ne.s32.totalorder %s84, %s85
      %p97 = scmp.eq.s32.totalorder %s33, 1
      %p98 = por %p96, %p97
      %p100 = scmp.ne.s32.totalorder %s85, %s99
      %p101 = scmp.eq.s32.totalorder %s33, 0
      %p102 = por %p100, %p101
      %s104 = sadd.s32 %s103, 1
      %p107 = scmp.eq.s32.totalorder %s27, 1
      %p108 = scmp.ne.s32.totalorder %s103, %s105
      %p109 = scmp.eq.s32.totalorder %s27, 0
      %p110 = por %p108, %p109
      %p111 = scmp.ne.s32.totalorder %s103, %s105
      %p112 = scmp.eq.s32.totalorder %s32, 1
      %p113 = por %p111, %p112
      %p114 = scmp.ne.s32.totalorder %s105, %s106
      %p115 = scmp.eq.s32.totalorder %s32, 0
      %p116 = por %p114, %p115
      %p117 = scmp.ne.s32.totalorder %s105, %s106
      %p118 = scmp.eq.s32.totalorder %s33, 1
      %p119 = por %p117, %p118
      %p121 = scmp.ne.s32.totalorder %s106, %s120
      %p122 = scmp.eq.s32.totalorder %s33, 0
      %p123 = por %p121, %p122
      %s125 = sadd.s32 %s124, 1
      %p128 = scmp.eq.s32.totalorder %s27, 1
      %p129 = scmp.ne.s32.totalorder %s124, %s126
      %p130 = scmp.eq.s32.totalorder %s27, 0
      %p131 = por %p129, %p130
      %p132 = scmp.ne.s32.totalorder %s124, %s126
      %p133 = scmp.eq.s32.totalorder %s32, 1
      %p134 = por %p132, %p133
      %p135 = scmp.ne.s32.totalorder %s126, %s127
      %p136 = scmp.eq.s32.totalorder %s32, 0
      %p137 = por %p135, %p136
      %p138 = scmp.ne.s32.totalorder %s126, %s127
      %p139 = scmp.eq.s32.totalorder %s33, 1
      %p140 = por %p138, %p139
      %p142 = scmp.ne.s32.totalorder %s127, %s141
      %p143 = scmp.eq.s32.totalorder %s33, 0
      %p144 = por %p142, %p143
      %s146 = sadd.s32 %s145, 1
      %p149 = scmp.eq.s32.totalorder %s27, 1
      %p150 = scmp.ne.s32.totalorder %s145, %s147
      %p151 = scmp.eq.s32.totalorder %s27, 0
      %p152 = por %p150, %p151
      %p153 = scmp.ne.s32.totalorder %s145, %s147
      %p154 = scmp.eq.s32.totalorder %s32, 1
      %p155 = por %p153, %p154
      %p156 = scmp.ne.s32.totalorder %s147, %s148
      %p157 = scmp.eq.s32.totalorder %s32, 0
      %p158 = por %p156, %p157
      %p159 = scmp.ne.s32.totalorder %s147, %s148
      %p160 = scmp.eq.s32.totalorder %s33, 1
      %p161 = por %p159, %p160
      %p163 = scmp.ne.s32.totalorder %s148, %s162
      %p164 = scmp.eq.s32.totalorder %s33, 0
      %p165 = por %p163, %p164
      %s167 = sadd.s32 %s166, 1
      %p170 = scmp.eq.s32.totalorder %s27, 1
      %p171 = scmp.ne.s32.totalorder %s166, %s168
      %p172 = scmp.eq.s32.totalorder %s27, 0
      %p173 = por %p171, %p172
      %p174 = scmp.ne.s32.totalorder %s166, %s168
      %p175 = scmp.eq.s32.totalorder %s32, 1
      %p176 = por %p174, %p175
      %p177 = scmp.ne.s32.totalorder %s168, %s169
      %p178 = scmp.eq.s32.totalorder %s32, 0
      %p179 = por %p177, %p178
      %p180 = scmp.ne.s32.totalorder %s168, %s169
      %p181 = scmp.eq.s32.totalorder %s33, 1
      %p182 = por %p180, %p181
      %p184 = scmp.ne.s32.totalorder %s169, %s183
      %p185 = scmp.eq.s32.totalorder %s33, 0
      %p186 = por %p184, %p185
      %s188 = sadd.s32 %s187, 1
      %p191 = scmp.eq.s32.totalorder %s27, 1
      %p192 = scmp.ne.s32.totalorder %s187, %s189
      %p193 = scmp.eq.s32.totalorder %s27, 0
      %p194 = por %p192, %p193
      %p195 = scmp.ne.s32.totalorder %s187, %s189
      %p196 = scmp.eq.s32.totalorder %s32, 1
      %p197 = por %p195, %p196
      %p198 = scmp.ne.s32.totalorder %s189, %s190
      %p199 = scmp.eq.s32.totalorder %s32, 0
      %p200 = por %p198, %p199
      %p201 = scmp.ne.s32.totalorder %s189, %s190
      %p202 = scmp.eq.s32.totalorder %s33, 1
      %p203 = por %p201, %p202
      %p205 = scmp.ne.s32.totalorder %s190, %s204
      %p206 = scmp.eq.s32.totalorder %s33, 0
      %p207 = por %p205, %p206
      %s209 = sadd.s32 %s208, 1
      %p212 = scmp.eq.s32.totalorder %s27, 1
      %p213 = scmp.ne.s32.totalorder %s208, %s210
      %p214 = scmp.eq.s32.totalorder %s27, 0
      %p215 = por %p213, %p214
      %p216 = scmp.ne.s32.totalorder %s208, %s210
      %p217 = scmp.eq.s32.totalorder %s32, 1
      %p218 = por %p216, %p217
      %p219 = scmp.ne.s32.totalorder %s210, %s211
      %p220 = scmp.eq.s32.totalorder %s32, 0
      %p221 = por %p219, %p220
      %p222 = scmp.ne.s32.totalorder %s210, %s211
      %p223 = scmp.eq.s32.totalorder %s33, 1
      %p224 = por %p222, %p223
      %p226 = scmp.ne.s32.totalorder %s211, %s225
      %p227 = scmp.eq.s32.totalorder %s33, 0
      %p228 = por %p226, %p227
      %s230 = sadd.s32 %s229, 1
      %p233 = scmp.eq.s32.totalorder %s27, 1
      %p234 = scmp.ne.s32.totalorder %s229, %s231
      %p235 = scmp.eq.s32.totalorder %s27, 0
      %p236 = por %p234, %p235
      %p237 = scmp.ne.s32.totalorder %s229, %s231
      %p238 = scmp.eq.s32.totalorder %s32, 1
      %p239 = por %p237, %p238
      %p240 = scmp.ne.s32.totalorder %s231, %s232
      %p241 = scmp.eq.s32.totalorder %s32, 0
      %p242 = por %p240, %p241
      %p243 = scmp.ne.s32.totalorder %s231, %s232
      %p244 = scmp.eq.s32.totalorder %s33, 1
      %p245 = por %p243, %p244
      %p247 = scmp.ne.s32.totalorder %s232, %s246
      %p248 = scmp.eq.s32.totalorder %s33, 0
      %p249 = por %p247, %p248
      %s251 = sadd.s32 %s250, 1
      %p254 = scmp.eq.s32.totalorder %s27, 1
      %p255 = scmp.ne.s32.totalorder %s250, %s252
      %p256 = scmp.eq.s32.totalorder %s27, 0
      %p257 = por %p255, %p256
      %p258 = scmp.ne.s32.totalorder %s250, %s252
      %p259 = scmp.eq.s32.totalorder %s32, 1
      %p260 = por %p258, %p259
      %p261 = scmp.ne.s32.totalorder %s252, %s253
      %p262 = scmp.eq.s32.totalorder %s32, 0
      %p263 = por %p261, %p262
      %p264 = scmp.ne.s32.totalorder %s252, %s253
      %p265 = scmp.eq.s32.totalorder %s33, 1
      %p266 = por %p264, %p265
      %p268 = scmp.ne.s32.totalorder %s253, %s267
      %p269 = scmp.eq.s32.totalorder %s33, 0
      %p270 = por %p268, %p269
      %s271 = ssub.s32 %s27, %s34
      %p272 = scmp.eq.s32.totalorder %s271, 0
      %s274 = sadd.s32 %s273, 1
      %s275 = scalar_select %p272, %s273, %s274
      %p278 = pneg %p272
      %p279 = scmp.eq.s32.totalorder %s27, 1
      %p280 = por %p278, %p279
      %p281 = scmp.ne.s32.totalorder %s273, %s276
      %p282 = scmp.eq.s32.totalorder %s27, 0
      %p283 = por %p281, %p282
      %p284 = scmp.ne.s32.totalorder %s273, %s276
      %p285 = scmp.eq.s32.totalorder %s32, 1
      %p286 = por %p284, %p285
      %p287 = scmp.ne.s32.totalorder %s276, %s277
      %p288 = scmp.eq.s32.totalorder %s32, 0
      %p289 = por %p287, %p288
      %p290 = scmp.ne.s32.totalorder %s276, %s277
      %p291 = scmp.eq.s32.totalorder %s33, 1
      %p292 = por %p290, %p291
      %p294 = scmp.ne.s32.totalorder %s277, %s293
      %p295 = scmp.eq.s32.totalorder %s33, 0
      %p296 = por %p294, %p295
      %p297 = scmp.le.s32.totalorder 1, %s27
      %p298 = scmp.lt.s32.totalorder %s27, 3
      %p299 = pnand %p297, %p298
      %p300 = pneg %p299
      // Predicated region
      $region9: #{tpu_custom_call.1} parent=5 // pred_check
        _
      $region10: #{tpu_custom_call.1} parent=5 // pred_check_branch
        %302 = sbr.rel (%p299) target = $region12
      $region11: #{tpu_custom_call.1} parent=5 // pred_region
        %s303 = ssub.s32 %s27, 1
        // Predicated region
        $region13: #{tpu_custom_call.1} parent=11 // pred_check
          %p304 = pneg %p74
        $region14: #{tpu_custom_call.1} parent=11 // pred_check_branch
          %306 = sbr.rel (%p304) target = $region16
        $region15: #{tpu_custom_call.1} parent=11 // pred_region
          _
        $region16: #{tpu_custom_call.1} parent=11 // pred_fallthru
          _
        // Predicated region
        $region17: #{tpu_custom_call.1} parent=11 // pred_check
          %p307 = pneg %p95
        $region18: #{tpu_custom_call.1} parent=11 // pred_check_branch
          %309 = sbr.rel (%p307) target = $region20
        $region19: #{tpu_custom_call.1} parent=11 // pred_region
          _
        $region20: #{tpu_custom_call.1} parent=11 // pred_fallthru
          _
        // Predicated region
        $region21: #{tpu_custom_call.1} parent=11 // pred_check
          %p310 = pneg %p116
        $region22: #{tpu_custom_call.1} parent=11 // pred_check_branch
          %312 = sbr.rel (%p310) target = $region24
        $region23: #{tpu_custom_call.1} parent=11 // pred_region
          _
        $region24: #{tpu_custom_call.1} parent=11 // pred_fallthru
          _
        // Predicated region
        $region25: #{tpu_custom_call.1} parent=11 // pred_check
          %p313 = pneg %p137
        $region26: #{tpu_custom_call.1} parent=11 // pred_check_branch
          %315 = sbr.rel (%p313) target = $region28
        $region27: #{tpu_custom_call.1} parent=11 // pred_region
          _
        $region28: #{tpu_custom_call.1} parent=11 // pred_fallthru
          _
        // Predicated region
        $region29: #{tpu_custom_call.1} parent=11 // pred_check
          %p316 = pneg %p158
        $region30: #{tpu_custom_call.1} parent=11 // pred_check_branch
          %318 = sbr.rel (%p316) target = $region32
        $region31: #{tpu_custom_call.1} parent=11 // pred_region
          %320 = vsyncadd [#allocation7], 0
          %s321 = sshll.u32 %s5, 4
          %s322 = int_to_ptr.hbm [resolvable:$true] %s321
          %s323 = sshll.u32 [#allocation6], 4
          %s324 = int_to_ptr.vmem [resolvable:$true] %s323
          %329 = dma.hbm_to_vmem [thread:$0]  %s322, 256, %s324, [#allocation7], 128, 128, 8
        $region32: #{tpu_custom_call.1} parent=11 // pred_fallthru
          _
        // Predicated region
        $region33: #{tpu_custom_call.1} parent=11 // pred_check
          %p330 = pneg %p179
        $region34: #{tpu_custom_call.1} parent=11 // pred_check_branch
          %332 = sbr.rel (%p330) target = $region36
        $region35: #{tpu_custom_call.1} parent=11 // pred_region
          %334 = vsyncadd [#allocation7], 0
          %s335 = sshll.u32 %s6, 4
          %s336 = int_to_ptr.hbm [resolvable:$true] %s335
          %s337 = sshll.u32 [#allocation8], 4
          %s338 = int_to_ptr.vmem [resolvable:$true] %s337
          %343 = dma.hbm_to_vmem [thread:$0]  %s336, 256, %s338, [#allocation7], 128, 128, 8
        $region36: #{tpu_custom_call.1} parent=11 // pred_fallthru
          _
        // Predicated region
        $region37: #{tpu_custom_call.1} parent=11 // pred_check
          %p344 = pneg %p200
        $region38: #{tpu_custom_call.1} parent=11 // pred_check_branch
          %346 = sbr.rel (%p344) target = $region40
        $region39: #{tpu_custom_call.1} parent=11 // pred_region
          %348 = vsyncadd [#allocation10], 0
          %s349 = sshll.u32 %s7, 4
          %s350 = int_to_ptr.hbm [resolvable:$true] %s349
          %s351 = sshll.u32 [#allocation9], 4
          %s352 = int_to_ptr.vmem [resolvable:$true] %s351
          %357 = dma.hbm_to_vmem [thread:$0]  %s350, 256, %s352, [#allocation10], 128, 128, 8
        $region40: #{tpu_custom_call.1} parent=11 // pred_fallthru
          _
        // Predicated region
        $region41: #{tpu_custom_call.1} parent=11 // pred_check
          %p358 = pneg %p221
        $region42: #{tpu_custom_call.1} parent=11 // pred_check_branch
          %360 = sbr.rel (%p358) target = $region44
        $region43: #{tpu_custom_call.1} parent=11 // pred_region
          %362 = vsyncadd [#allocation10], 0
          %s363 = sshll.u32 %s8, 4
          %s364 = int_to_ptr.hbm [resolvable:$true] %s363
          %s365 = sshll.u32 [#allocation11], 4
          %s366 = int_to_ptr.vmem [resolvable:$true] %s365
          %371 = dma.hbm_to_vmem [thread:$0]  %s364, 256, %s366, [#allocation10], 128, 128, 8
        $region44: #{tpu_custom_call.1} parent=11 // pred_fallthru
          _
        // Predicated region
        $region45: #{tpu_custom_call.1} parent=11 // pred_check
          %p372 = pneg %p242
        $region46: #{tpu_custom_call.1} parent=11 // pred_check_branch
          %374 = sbr.rel (%p372) target = $region48
        $region47: #{tpu_custom_call.1} parent=11 // pred_region
          _
        $region48: #{tpu_custom_call.1} parent=11 // pred_fallthru
          _
        // Predicated region
        $region49: #{tpu_custom_call.1} parent=11 // pred_check
          %p375 = pneg %p263
        $region50: #{tpu_custom_call.1} parent=11 // pred_check_branch
          %377 = sbr.rel (%p375) target = $region52
        $region51: #{tpu_custom_call.1} parent=11 // pred_region
          _
        $region52: #{tpu_custom_call.1} parent=11 // pred_fallthru
          _
      $region12: #{tpu_custom_call.1} parent=5 // pred_fallthru
        _
      %p378 = scmp.lt.s32.totalorder %s27, 2
      // Predicated region
      $region53: #{tpu_custom_call.1} parent=5 // pred_check
        %p379 = pneg %p378
      $region54: #{tpu_custom_call.1} parent=5 // pred_check_branch
        %381 = sbr.rel (%p379) target = $region56
      $region55: #{tpu_custom_call.1} parent=5 // pred_region
        // Predicated region
        $region57: #{tpu_custom_call.1} parent=55 // pred_check
          %p382 = pneg %p47
        $region58: #{tpu_custom_call.1} parent=55 // pred_check_branch
          %384 = sbr.rel (%p382) target = $region60
        $region59: #{tpu_custom_call.1} parent=55 // pred_region
          %s385 = sand.u32 %s37, 1
          %s386 = scalar_lea.sflag [#allocation4], %s385
          %s387 = sand.u32 %s37, 1
          %s388 = smul.addr %s387, 64
          %s389 = scalar_lea.vmem [#allocation3], %s388
          %391 = vsyncadd %s386, 0
          %s392 = smul.addr %s27, 8
          %s393 = smul.addr %s392, 8
          %s394 = scalar_lea.hbm %s0, %s393
          %s395 = sshll.u32 %s394, 4
          %s396 = int_to_ptr.hbm [resolvable:$true] %s395
          %s397 = sshll.u32 %s389, 4
          %s398 = int_to_ptr.vmem [resolvable:$true] %s397
          %403 = dma.hbm_to_vmem [thread:$0]  %s396, 1024, %s398, %s386, 128, 128, 8
        $region60: #{tpu_custom_call.1} parent=55 // pred_fallthru
          _
      $region56: #{tpu_custom_call.1} parent=5 // pred_fallthru
        _
      %p404 = scmp.le.s32.totalorder 1, %s27
      %p405 = scmp.lt.s32.totalorder %s27, 3
      %p406 = pnand %p404, %p405
      %p407 = pneg %p406
      // Predicated region
      $region61: #{tpu_custom_call.1} parent=5 // pred_check
        _
      $region62: #{tpu_custom_call.1} parent=5 // pred_check_branch
        %409 = sbr.rel (%p406) target = $region64
      $region63: #{tpu_custom_call.1} parent=5 // pred_region
        %s410 = ssub.s32 %s27, 1
        %s411 = sand.u32 %s40, 1
        %s412 = scalar_lea.sflag [#allocation4], %s411
        %s413 = sand.u32 %s40, 1
        %s414 = smul.addr %s413, 64
        %s415 = scalar_lea.vmem [#allocation3], %s414
        // Predicated region
        $region65: #{tpu_custom_call.1} parent=63 // pred_check
          %p416 = pneg %p53
        $region66: #{tpu_custom_call.1} parent=63 // pred_check_branch
          %418 = sbr.rel (%p416) target = $region68
        $region67: #{tpu_custom_call.1} parent=63 // pred_region
          %420 = dma.done %s412, 1024
        $region68: #{tpu_custom_call.1} parent=63 // pred_fallthru
          _
        // Predicated region
        $region69: #{tpu_custom_call.1} parent=63 // pred_check
          %p421 = pneg %p158
        $region70: #{tpu_custom_call.1} parent=63 // pred_check_branch
          %423 = sbr.rel (%p421) target = $region72
        $region71: #{tpu_custom_call.1} parent=63 // pred_region
          %425 = dma.done [#allocation7], 256
        $region72: #{tpu_custom_call.1} parent=63 // pred_fallthru
          _
        // Predicated region
        $region73: #{tpu_custom_call.1} parent=63 // pred_check
          %p426 = pneg %p179
        $region74: #{tpu_custom_call.1} parent=63 // pred_check_branch
          %428 = sbr.rel (%p426) target = $region76
        $region75: #{tpu_custom_call.1} parent=63 // pred_region
          %430 = dma.done [#allocation7], 256
        $region76: #{tpu_custom_call.1} parent=63 // pred_fallthru
          _
        // Predicated region
        $region77: #{tpu_custom_call.1} parent=63 // pred_check
          %p431 = pneg %p200
        $region78: #{tpu_custom_call.1} parent=63 // pred_check_branch
          %433 = sbr.rel (%p431) target = $region80
        $region79: #{tpu_custom_call.1} parent=63 // pred_region
          %435 = dma.done [#allocation10], 256
        $region80: #{tpu_custom_call.1} parent=63 // pred_fallthru
          _
        // Predicated region
        $region81: #{tpu_custom_call.1} parent=63 // pred_check
          %p436 = pneg %p221
        $region82: #{tpu_custom_call.1} parent=63 // pred_check_branch
          %438 = sbr.rel (%p436) target = $region84
        $region83: #{tpu_custom_call.1} parent=63 // pred_region
          %440 = dma.done [#allocation10], 256
        $region84: #{tpu_custom_call.1} parent=63 // pred_fallthru
          _
        %s441 = sand.u32 %s40, 1
        %s442 = scalar_lea.sflag [#allocation4], %s441
        %s443 = sand.u32 %s40, 1
        %s444 = smul.addr %s443, 64
        %s445 = scalar_lea.vmem [#allocation3], %s444
        %p446 = pneg %p53
        %p447 = pneg %p50
        %p448 = pneg %p74
        %p449 = pneg %p71
        %p450 = pneg %p95
        %p451 = pneg %p92
        %p452 = pneg %p116
        %p453 = pneg %p113
        %p454 = pneg %p137
        %p455 = pneg %p134
        %p456 = pneg %p158
        %p457 = pneg %p155
        %p458 = pneg %p179
        %p459 = pneg %p176
        %p460 = pneg %p200
        %p461 = pneg %p197
        %p462 = pneg %p221
        %p463 = pneg %p218
        %p464 = pneg %p242
        %p465 = pneg %p239
        %p466 = pneg %p263
        %p467 = pneg %p260
        %p468 = pneg %p289
        %p469 = pneg %p286
        %s470 = sand.u32 %s276, 1
        %s471 = scalar_lea.sflag [#allocation5], %s470
        %s472 = sand.u32 %s276, 1
        %s473 = smul.addr %s472, 128
        %s474 = scalar_lea.vmem [#allocation12], %s473
        %v475 = vld [vmem:[%s415] sm:$0xff]
        %v476 = vld [vmem:[%s415 + $0x8] sm:$0xff]
        %v477 = vld [vmem:[%s415 + $0x10] sm:$0xff]
        %v478 = vld [vmem:[%s415 + $0x18] sm:$0xff]
        %v479 = vld [vmem:[%s415 + $0x20] sm:$0xff]
        %v480 = vld [vmem:[%s415 + $0x28] sm:$0xff]
        %v481 = vld [vmem:[%s415 + $0x30] sm:$0xff]
        %v482 = vld [vmem:[%s415 + $0x38] sm:$0xff]
        %s483 = scalar_lea.vmem %s474, 64 [#allocation12]
        %vm484 = vcmask 130048
        %485 = vst.msk [vmem:[%s483] sm:$0xff] %vm484, %v475
        %486 = vst.msk [vmem:[%s483 + $0x8] sm:$0xff] %vm484, %v476
        %487 = vst.msk [vmem:[%s483 + $0x10] sm:$0xff] %vm484, %v477
        %488 = vst.msk [vmem:[%s483 + $0x18] sm:$0xff] %vm484, %v478
        %489 = vst.msk [vmem:[%s483 + $0x20] sm:$0xff] %vm484, %v479
        %490 = vst.msk [vmem:[%s483 + $0x28] sm:$0xff] %vm484, %v480
        %491 = vst.msk [vmem:[%s483 + $0x30] sm:$0xff] %vm484, %v481
        %492 = vst.msk [vmem:[%s483 + $0x38] sm:$0xff] %vm484, %v482
        %v493 = vld [vmem:[%s415] sm:$0xff]
        %v494 = vld [vmem:[%s415 + $0x8] sm:$0xff]
        %v495 = vld [vmem:[%s415 + $0x10] sm:$0xff]
        %v496 = vld [vmem:[%s415 + $0x18] sm:$0xff]
        %v497 = vld [vmem:[%s415 + $0x20] sm:$0xff]
        %v498 = vld [vmem:[%s415 + $0x28] sm:$0xff]
        %v499 = vld [vmem:[%s415 + $0x30] sm:$0xff]
        %v500 = vld [vmem:[%s415 + $0x38] sm:$0xff]
        %vm509 = vcmask 1046528
        %v510 = vrot.slane %v493, 1
        %v511 = vrot.slane %v494, 1
        %v512 = vsel %vm509, %v510, %v511
        %v513 = vrot.slane %v495, 1
        %v514 = vrot.slane %v496, 1
        %v515 = vsel %vm509, %v513, %v514
        %v516 = vrot.slane %v497, 1
        %v517 = vrot.slane %v498, 1
        %v518 = vsel %vm509, %v516, %v517
        %v519 = vrot.slane %v499, 1
        %v520 = vrot.slane %v500, 1
        %v521 = vsel %vm509, %v519, %v520
        %v530 = vmax.f32 %v493, %v512
        %v531 = vmax.f32 %v494, %v511
        %v532 = vmax.f32 %v495, %v515
        %v533 = vmax.f32 %v496, %v514
        %v534 = vmax.f32 %v497, %v518
        %v535 = vmax.f32 %v498, %v517
        %v536 = vmax.f32 %v499, %v521
        %v537 = vmax.f32 %v500, %v520
        %546 = vrot.lane.b32.xlu0 %v530, 127
        %v547 = vpop.permute.xlu0 %546
        %548 = vrot.lane.b32.xlu0 %v531, 127
        %v549 = vpop.permute.xlu0 %548
        %550 = vrot.lane.b32.xlu0 %v532, 127
        %v551 = vpop.permute.xlu0 %550
        %552 = vrot.lane.b32.xlu0 %v533, 127
        %v553 = vpop.permute.xlu0 %552
        %554 = vrot.lane.b32.xlu0 %v534, 127
        %v555 = vpop.permute.xlu0 %554
        %556 = vrot.lane.b32.xlu0 %v535, 127
        %v557 = vpop.permute.xlu0 %556
        %558 = vrot.lane.b32.xlu0 %v536, 127
        %v559 = vpop.permute.xlu0 %558
        %560 = vrot.lane.b32.xlu0 %v537, 127
        %v561 = vpop.permute.xlu0 %560
        %v570 = vmax.f32 %v530, %v547
        %v571 = vmax.f32 %v531, %v549
        %v572 = vmax.f32 %v532, %v551
        %v573 = vmax.f32 %v533, %v553
        %v574 = vmax.f32 %v534, %v555
        %v575 = vmax.f32 %v535, %v557
        %v576 = vmax.f32 %v536, %v559
        %v577 = vmax.f32 %v537, %v561
        %v578 = vld [vmem:[%s1] sm:$0x1]
        %v579 = vld [vmem:[%s1 + $0x1] sm:$0x1]
        %v580 = vld [vmem:[%s1 + $0x2] sm:$0x1]
        %v581 = vld [vmem:[%s1 + $0x3] sm:$0x1]
        %v586 = vperm.slane %v578, 0
        %v587 = vperm.slane %v579, 0
        %v588 = vperm.slane %v580, 0
        %v589 = vperm.slane %v581, 0
        %590 = vset.pattern.permute.xlu0 0
        %591 = vperm.xlu0 %590, %v586
        %v592 = vpop.permute.xlu0 %591
        %594 = vset.pattern.permute.xlu0 0
        %595 = vperm.xlu0 %594, %v587
        %v596 = vpop.permute.xlu0 %595
        %598 = vset.pattern.permute.xlu0 0
        %599 = vperm.xlu0 %598, %v588
        %v600 = vpop.permute.xlu0 %599
        %602 = vset.pattern.permute.xlu0 0
        %603 = vperm.xlu0 %602, %v589
        %v604 = vpop.permute.xlu0 %603
        %v606 = vmul.f32 %v592, %v570
        %v607 = vmul.f32 %v592, %v571
        %v608 = vmul.f32 %v596, %v572
        %v609 = vmul.f32 %v596, %v573
        %v610 = vmul.f32 %v600, %v574
        %v611 = vmul.f32 %v600, %v575
        %v612 = vmul.f32 %v604, %v576
        %v613 = vmul.f32 %v604, %v577
        %vm614 = vcmask 121856
        %v615 = vsel %vm614, %v606, 0.0
        %v616 = vsel %vm614, %v608, 0.0
        %v617 = vadd.f32 %v615, %v616
        %v618 = vsel %vm614, %v610, 0.0
        %v619 = vadd.f32 %v617, %v618
        %v620 = vsel %vm614, %v612, 0.0
        %v621 = vadd.f32 %v619, %v620
        %vm622 = vcmask 120832
        %v623 = vsel %vm622, %v607, 0.0
        %v624 = vsel %vm622, %v609, 0.0
        %v625 = vadd.f32 %v623, %v624
        %v626 = vsel %vm622, %v611, 0.0
        %v627 = vadd.f32 %v625, %v626
        %v628 = vsel %vm622, %v613, 0.0
        %v629 = vadd.f32 %v627, %v628
        %v630 = vadd.f32 %v621, 0.0
        %v631 = vadd.f32 %v629, 0.0
        %v632 = vld [vmem:[#allocation2] sm:$0x1]
        %v634 = vperm.slane %v632, 0
        %635 = vset.pattern.permute.xlu0 0
        %636 = vperm.xlu0 %635, %v634
        %v637 = vpop.permute.xlu0 %636
        %v639 = vadd.f32 %v630, %v637
        %v640 = vadd.f32 %v631, %v637
        %v641 = vld [vmem:[%s4] sm:$0xff]
        %v642 = vld [vmem:[%s4 + $0x8] sm:$0xff]
        %v644 = vsel %vm614, %v639, 0
        %v647 = vsel %vm614, %v640, 0
        %v650 = vsel %vm614, %v641, 0
        %v653 = vsel %vm614, %v642, 0
        %655 = vmatpush.xpose.msra.mxu0 0.0
        %656 = vmatpush.xpose.msra.mxu0 0.0
        %657 = vmatpush.xpose.msra.mxu0 0.0
        %658 = vmatpush.xpose.msra.mxu0 0.0
        %659 = vmatpush.xpose.msra.mxu0 0.0
        %660 = vmatpush.xpose.msra.mxu0 0.0
        %661 = vmatpush.xpose.msra.mxu0 0.0
        %662 = vmatpush.xpose.msra.mxu0 0.0
        %663 = vmatpush.xpose.msra.mxu0 0.0
        %664 = vmatpush.xpose.msra.mxu0 0.0
        %665 = vmatpush.xpose.msra.mxu0 0.0
        %666 = vmatpush.xpose.msra.mxu0 0.0
        %667 = vmatpush.xpose.msra.mxu0 0.0
        %668 = vmatpush.xpose.msra.mxu0 0.0
        %669 = vmatpush.xpose.msra.mxu0 %v653
        %670 = vmatpush.xpose.msra.mxu0 %v650
        %671 = vmatmul.f32.gmra.mxu0 %v644
        %v672 = vpop.f32.mrf.mxu0
        %v673 = vadd.f32 0.0, %v672
        %674 = vmatmul.f32.gmra.mxu0 %v647
        %v675 = vpop.f32.mrf.mxu0
        %v676 = vadd.f32 0.0, %v675
        %677 = vdwg.mxu0
        %v678 = vld [vmem:[%s3] sm:$0xff]
        %v679 = vld [vmem:[%s3 + $0x8] sm:$0xff]
        %v681 = vsel %vm614, %v678, 0
        %v684 = vsel %vm614, %v679, 0
        %v687 = vsel %vm509, %v676, 0
        %689 = vmatpush.msra.mxu0 0.0
        %690 = vmatpush.msra.mxu0 0.0
        %691 = vmatpush.msra.mxu0 0.0
        %692 = vmatpush.msra.mxu0 0.0
        %693 = vmatpush.msra.mxu0 0.0
        %694 = vmatpush.msra.mxu0 0.0
        %695 = vmatpush.msra.mxu0 0.0
        %696 = vmatpush.msra.mxu0 0.0
        %697 = vmatpush.msra.mxu0 0.0
        %698 = vmatpush.msra.mxu0 0.0
        %699 = vmatpush.msra.mxu0 0.0
        %700 = vmatpush.msra.mxu0 0.0
        %701 = vmatpush.msra.mxu0 0.0
        %702 = vmatpush.msra.mxu0 0.0
        %703 = vmatpush.msra.mxu0 %v687
        %704 = vmatpush.msra.mxu0 %v673
        %705 = vmatmul.f32.gmra.mxu0 %v681
        %v706 = vpop.f32.mrf.mxu0
        %v707 = vadd.f32 0.0, %v706
        %708 = vmatmul.f32.gmra.mxu0 %v684
        %v709 = vpop.f32.mrf.mxu0
        %v710 = vadd.f32 0.0, %v709
        %711 = vdwg.mxu0
        %712 = vst.msk [vmem:[%s474] sm:$0xff] %vm484, %v707
        %713 = vst.msk [vmem:[%s474 + $0x8] sm:$0xff] %vm484, %v710
        %v714 = vld [vmem:[%s415] sm:$0xff]
        %v715 = vld [vmem:[%s415 + $0x8] sm:$0xff]
        %v716 = vld [vmem:[%s415 + $0x10] sm:$0xff]
        %v717 = vld [vmem:[%s415 + $0x18] sm:$0xff]
        %v718 = vld [vmem:[%s415 + $0x20] sm:$0xff]
        %v719 = vld [vmem:[%s415 + $0x28] sm:$0xff]
        %v720 = vld [vmem:[%s415 + $0x30] sm:$0xff]
        %v721 = vld [vmem:[%s415 + $0x38] sm:$0xff]
        %v730 = vrot.slane %v714, 1
        %v731 = vrot.slane %v715, 1
        %v732 = vsel %vm509, %v730, %v731
        %v733 = vrot.slane %v716, 1
        %v734 = vrot.slane %v717, 1
        %v735 = vsel %vm509, %v733, %v734
        %v736 = vrot.slane %v718, 1
        %v737 = vrot.slane %v719, 1
        %v738 = vsel %vm509, %v736, %v737
        %v739 = vrot.slane %v720, 1
        %v740 = vrot.slane %v721, 1
        %v741 = vsel %vm509, %v739, %v740
        %v750 = vmax.f32 %v714, %v732
        %v751 = vmax.f32 %v715, %v731
        %v752 = vmax.f32 %v716, %v735
        %v753 = vmax.f32 %v717, %v734
        %v754 = vmax.f32 %v718, %v738
        %v755 = vmax.f32 %v719, %v737
        %v756 = vmax.f32 %v720, %v741
        %v757 = vmax.f32 %v721, %v740
        %vm758 = vcmask 1045504
        %v759 = vrot.slane %v714, 2
        %v760 = vrot.slane %v715, 2
        %v761 = vsel %vm758, %v759, %v760
        %v762 = vrot.slane %v716, 2
        %v763 = vrot.slane %v717, 2
        %v764 = vsel %vm758, %v762, %v763
        %v765 = vrot.slane %v718, 2
        %v766 = vrot.slane %v719, 2
        %v767 = vsel %vm758, %v765, %v766
        %v768 = vrot.slane %v720, 2
        %v769 = vrot.slane %v721, 2
        %v770 = vsel %vm758, %v768, %v769
        %v779 = vmax.f32 %v750, %v761
        %v780 = vmax.f32 %v751, %v760
        %v781 = vmax.f32 %v752, %v764
        %v782 = vmax.f32 %v753, %v763
        %v783 = vmax.f32 %v754, %v767
        %v784 = vmax.f32 %v755, %v766
        %v785 = vmax.f32 %v756, %v770
        %v786 = vmax.f32 %v757, %v769
        %795 = vrot.lane.b32.xlu0 %v779, 127
        %v796 = vpop.permute.xlu0 %795
        %797 = vrot.lane.b32.xlu0 %v780, 127
        %v798 = vpop.permute.xlu0 %797
        %799 = vrot.lane.b32.xlu0 %v781, 127
        %v800 = vpop.permute.xlu0 %799
        %801 = vrot.lane.b32.xlu0 %v782, 127
        %v802 = vpop.permute.xlu0 %801
        %803 = vrot.lane.b32.xlu0 %v783, 127
        %v804 = vpop.permute.xlu0 %803
        %805 = vrot.lane.b32.xlu0 %v784, 127
        %v806 = vpop.permute.xlu0 %805
        %807 = vrot.lane.b32.xlu0 %v785, 127
        %v808 = vpop.permute.xlu0 %807
        %809 = vrot.lane.b32.xlu0 %v786, 127
        %v810 = vpop.permute.xlu0 %809
        %v819 = vmax.f32 %v779, %v796
        %v820 = vmax.f32 %v780, %v798
        %v821 = vmax.f32 %v781, %v800
        %v822 = vmax.f32 %v782, %v802
        %v823 = vmax.f32 %v783, %v804
        %v824 = vmax.f32 %v784, %v806
        %v825 = vmax.f32 %v785, %v808
        %v826 = vmax.f32 %v786, %v810
        %827 = vrot.lane.b32.xlu0 %v779, 126
        %v828 = vpop.permute.xlu0 %827
        %829 = vrot.lane.b32.xlu0 %v780, 126
        %v830 = vpop.permute.xlu0 %829
        %831 = vrot.lane.b32.xlu0 %v781, 126
        %v832 = vpop.permute.xlu0 %831
        %833 = vrot.lane.b32.xlu0 %v782, 126
        %v834 = vpop.permute.xlu0 %833
        %835 = vrot.lane.b32.xlu0 %v783, 126
        %v836 = vpop.permute.xlu0 %835
        %837 = vrot.lane.b32.xlu0 %v784, 126
        %v838 = vpop.permute.xlu0 %837
        %839 = vrot.lane.b32.xlu0 %v785, 126
        %v840 = vpop.permute.xlu0 %839
        %841 = vrot.lane.b32.xlu0 %v786, 126
        %v842 = vpop.permute.xlu0 %841
        %v851 = vmax.f32 %v819, %v828
        %v852 = vmax.f32 %v820, %v830
        %v853 = vmax.f32 %v821, %v832
        %v854 = vmax.f32 %v822, %v834
        %v855 = vmax.f32 %v823, %v836
        %v856 = vmax.f32 %v824, %v838
        %v857 = vmax.f32 %v825, %v840
        %v858 = vmax.f32 %v826, %v842
        %v859 = vld [vmem:[%s1] sm:$0x1]
        %v860 = vld [vmem:[%s1 + $0x1] sm:$0x1]
        %v861 = vld [vmem:[%s1 + $0x2] sm:$0x1]
        %v862 = vld [vmem:[%s1 + $0x3] sm:$0x1]
        %v867 = vperm.slane %v859, 0
        %v868 = vperm.slane %v860, 0
        %v869 = vperm.slane %v861, 0
        %v870 = vperm.slane %v862, 0
        %871 = vset.pattern.permute.xlu0 0
        %872 = vperm.xlu0 %871, %v867
        %v873 = vpop.permute.xlu0 %872
        %875 = vset.pattern.permute.xlu0 0
        %876 = vperm.xlu0 %875, %v868
        %v877 = vpop.permute.xlu0 %876
        %879 = vset.pattern.permute.xlu0 0
        %880 = vperm.xlu0 %879, %v869
        %v881 = vpop.permute.xlu0 %880
        %883 = vset.pattern.permute.xlu0 0
        %884 = vperm.xlu0 %883, %v870
        %v885 = vpop.permute.xlu0 %884
        %v887 = vmul.f32 %v873, %v851
        %v888 = vmul.f32 %v873, %v852
        %v889 = vmul.f32 %v877, %v853
        %v890 = vmul.f32 %v877, %v854
        %v891 = vmul.f32 %v881, %v855
        %v892 = vmul.f32 %v881, %v856
        %v893 = vmul.f32 %v885, %v857
        %v894 = vmul.f32 %v885, %v858
        %vm895 = vcmask 105472
        %v896 = vsel %vm895, %v887, 0.0
        %v897 = vsel %vm895, %v889, 0.0
        %v898 = vadd.f32 %v896, %v897
        %v899 = vsel %vm895, %v891, 0.0
        %v900 = vadd.f32 %v898, %v899
        %v901 = vsel %vm895, %v893, 0.0
        %v902 = vadd.f32 %v900, %v901
        %vm903 = vcmask 102400
        %v904 = vsel %vm903, %v888, 0.0
        %v905 = vsel %vm903, %v890, 0.0
        %v906 = vadd.f32 %v904, %v905
        %v907 = vsel %vm903, %v892, 0.0
        %v908 = vadd.f32 %v906, %v907
        %v909 = vsel %vm903, %v894, 0.0
        %v910 = vadd.f32 %v908, %v909
        %v911 = vadd.f32 %v902, 0.0
        %v912 = vadd.f32 %v910, 0.0
        %v913 = vld [vmem:[#allocation2] sm:$0x1]
        %v915 = vperm.slane %v913, 0
        %916 = vset.pattern.permute.xlu0 0
        %917 = vperm.xlu0 %916, %v915
        %v918 = vpop.permute.xlu0 %917
        %v920 = vadd.f32 %v911, %v918
        %v921 = vadd.f32 %v912, %v918
        %v922 = vld [vmem:[#allocation8] sm:$0xff]
        %v923 = vld [vmem:[#allocation8 + $0x8] sm:$0xff]
        %v925 = vsel %vm895, %v920, 0
        %v928 = vsel %vm895, %v921, 0
        %v931 = vsel %vm895, %v922, 0
        %v934 = vsel %vm895, %v923, 0
        %936 = vmatpush.xpose.msra.mxu0 0.0
        %937 = vmatpush.xpose.msra.mxu0 0.0
        %938 = vmatpush.xpose.msra.mxu0 0.0
        %939 = vmatpush.xpose.msra.mxu0 0.0
        %940 = vmatpush.xpose.msra.mxu0 0.0
        %941 = vmatpush.xpose.msra.mxu0 0.0
        %942 = vmatpush.xpose.msra.mxu0 0.0
        %943 = vmatpush.xpose.msra.mxu0 0.0
        %944 = vmatpush.xpose.msra.mxu0 0.0
        %945 = vmatpush.xpose.msra.mxu0 0.0
        %946 = vmatpush.xpose.msra.mxu0 0.0
        %947 = vmatpush.xpose.msra.mxu0 0.0
        %948 = vmatpush.xpose.msra.mxu0 0.0
        %949 = vmatpush.xpose.msra.mxu0 0.0
        %950 = vmatpush.xpose.msra.mxu0 %v934
        %951 = vmatpush.xpose.msra.mxu0 %v931
        %952 = vmatmul.f32.gmra.mxu0 %v925
        %v953 = vpop.f32.mrf.mxu0
        %v954 = vadd.f32 0.0, %v953
        %955 = vmatmul.f32.gmra.mxu0 %v928
        %v956 = vpop.f32.mrf.mxu0
        %v957 = vadd.f32 0.0, %v956
        %958 = vdwg.mxu0
        %v959 = vld [vmem:[#allocation6] sm:$0xff]
        %v960 = vld [vmem:[#allocation6 + $0x8] sm:$0xff]
        %v962 = vsel %vm895, %v959, 0
        %v965 = vsel %vm895, %v960, 0
        %vm967 = vcmask 1044480
        %v969 = vsel %vm967, %v957, 0
        %971 = vmatpush.msra.mxu0 0.0
        %972 = vmatpush.msra.mxu0 0.0
        %973 = vmatpush.msra.mxu0 0.0
        %974 = vmatpush.msra.mxu0 0.0
        %975 = vmatpush.msra.mxu0 0.0
        %976 = vmatpush.msra.mxu0 0.0
        %977 = vmatpush.msra.mxu0 0.0
        %978 = vmatpush.msra.mxu0 0.0
        %979 = vmatpush.msra.mxu0 0.0
        %980 = vmatpush.msra.mxu0 0.0
        %981 = vmatpush.msra.mxu0 0.0
        %982 = vmatpush.msra.mxu0 0.0
        %983 = vmatpush.msra.mxu0 0.0
        %984 = vmatpush.msra.mxu0 0.0
        %985 = vmatpush.msra.mxu0 %v969
        %986 = vmatpush.msra.mxu0 %v954
        %987 = vmatmul.f32.gmra.mxu0 %v962
        %v988 = vpop.f32.mrf.mxu0
        %v989 = vadd.f32 0.0, %v988
        %990 = vmatmul.f32.gmra.mxu0 %v965
        %v991 = vpop.f32.mrf.mxu0
        %v992 = vadd.f32 0.0, %v991
        %993 = vdwg.mxu0
        %s994 = scalar_lea.vmem %s474, 16 [#allocation12]
        %995 = vst.msk [vmem:[%s994] sm:$0xff] %vm484, %v989
        %996 = vst.msk [vmem:[%s994 + $0x8] sm:$0xff] %vm484, %v992
        %v997 = vld [vmem:[%s415] sm:$0xff]
        %v998 = vld [vmem:[%s415 + $0x8] sm:$0xff]
        %v999 = vld [vmem:[%s415 + $0x10] sm:$0xff]
        %v1000 = vld [vmem:[%s415 + $0x18] sm:$0xff]
        %v1001 = vld [vmem:[%s415 + $0x20] sm:$0xff]
        %v1002 = vld [vmem:[%s415 + $0x28] sm:$0xff]
        %v1003 = vld [vmem:[%s415 + $0x30] sm:$0xff]
        %v1004 = vld [vmem:[%s415 + $0x38] sm:$0xff]
        %v1013 = vrot.slane %v997, 1
        %v1014 = vrot.slane %v998, 1
        %v1015 = vsel %vm509, %v1013, %v1014
        %v1016 = vrot.slane %v999, 1
        %v1017 = vrot.slane %v1000, 1
        %v1018 = vsel %vm509, %v1016, %v1017
        %v1019 = vrot.slane %v1001, 1
        %v1020 = vrot.slane %v1002, 1
        %v1021 = vsel %vm509, %v1019, %v1020
        %v1022 = vrot.slane %v1003, 1
        %v1023 = vrot.slane %v1004, 1
        %v1024 = vsel %vm509, %v1022, %v1023
        %v1033 = vmax.f32 %v997, %v1015
        %v1034 = vmax.f32 %v998, %v1014
        %v1035 = vmax.f32 %v999, %v1018
        %v1036 = vmax.f32 %v1000, %v1017
        %v1037 = vmax.f32 %v1001, %v1021
        %v1038 = vmax.f32 %v1002, %v1020
        %v1039 = vmax.f32 %v1003, %v1024
        %v1040 = vmax.f32 %v1004, %v1023
        %v1041 = vrot.slane %v997, 2
        %v1042 = vrot.slane %v998, 2
        %v1043 = vsel %vm758, %v1041, %v1042
        %v1044 = vrot.slane %v999, 2
        %v1045 = vrot.slane %v1000, 2
        %v1046 = vsel %vm758, %v1044, %v1045
        %v1047 = vrot.slane %v1001, 2
        %v1048 = vrot.slane %v1002, 2
        %v1049 = vsel %vm758, %v1047, %v1048
        %v1050 = vrot.slane %v1003, 2
        %v1051 = vrot.slane %v1004, 2
        %v1052 = vsel %vm758, %v1050, %v1051
        %v1061 = vmax.f32 %v1033, %v1043
        %v1062 = vmax.f32 %v1034, %v1042
        %v1063 = vmax.f32 %v1035, %v1046
        %v1064 = vmax.f32 %v1036, %v1045
        %v1065 = vmax.f32 %v1037, %v1049
        %v1066 = vmax.f32 %v1038, %v1048
        %v1067 = vmax.f32 %v1039, %v1052
        %v1068 = vmax.f32 %v1040, %v1051
        %v1069 = vrot.slane %v997, 3
        %v1070 = vrot.slane %v998, 3
        %v1071 = vsel %vm967, %v1069, %v1070
        %v1072 = vrot.slane %v999, 3
        %v1073 = vrot.slane %v1000, 3
        %v1074 = vsel %vm967, %v1072, %v1073
        %v1075 = vrot.slane %v1001, 3
        %v1076 = vrot.slane %v1002, 3
        %v1077 = vsel %vm967, %v1075, %v1076
        %v1078 = vrot.slane %v1003, 3
        %v1079 = vrot.slane %v1004, 3
        %v1080 = vsel %vm967, %v1078, %v1079
        %v1089 = vmax.f32 %v1061, %v1071
        %v1090 = vmax.f32 %v1062, %v1070
        %v1091 = vmax.f32 %v1063, %v1074
        %v1092 = vmax.f32 %v1064, %v1073
        %v1093 = vmax.f32 %v1065, %v1077
        %v1094 = vmax.f32 %v1066, %v1076
        %v1095 = vmax.f32 %v1067, %v1080
        %v1096 = vmax.f32 %v1068, %v1079
        %vm1097 = vcmask 1043456
        %v1098 = vrot.slane %v997, 4
        %v1099 = vrot.slane %v998, 4
        %v1100 = vsel %vm1097, %v1098, %v1099
        %v1101 = vrot.slane %v999, 4
        %v1102 = vrot.slane %v1000, 4
        %v1103 = vsel %vm1097, %v1101, %v1102
        %v1104 = vrot.slane %v1001, 4
        %v1105 = vrot.slane %v1002, 4
        %v1106 = vsel %vm1097, %v1104, %v1105
        %v1107 = vrot.slane %v1003, 4
        %v1108 = vrot.slane %v1004, 4
        %v1109 = vsel %vm1097, %v1107, %v1108
        %v1118 = vmax.f32 %v1089, %v1100
        %v1119 = vmax.f32 %v1090, %v1099
        %v1120 = vmax.f32 %v1091, %v1103
        %v1121 = vmax.f32 %v1092, %v1102
        %v1122 = vmax.f32 %v1093, %v1106
        %v1123 = vmax.f32 %v1094, %v1105
        %v1124 = vmax.f32 %v1095, %v1109
        %v1125 = vmax.f32 %v1096, %v1108
        %1134 = vrot.lane.b32.xlu0 %v1118, 127
        %v1135 = vpop.permute.xlu0 %1134
        %1136 = vrot.lane.b32.xlu0 %v1119, 127
        %v1137 = vpop.permute.xlu0 %1136
        %1138 = vrot.lane.b32.xlu0 %v1120, 127
        %v1139 = vpop.permute.xlu0 %1138
        %1140 = vrot.lane.b32.xlu0 %v1121, 127
        %v1141 = vpop.permute.xlu0 %1140
        %1142 = vrot.lane.b32.xlu0 %v1122, 127
        %v1143 = vpop.permute.xlu0 %1142
        %1144 = vrot.lane.b32.xlu0 %v1123, 127
        %v1145 = vpop.permute.xlu0 %1144
        %1146 = vrot.lane.b32.xlu0 %v1124, 127
        %v1147 = vpop.permute.xlu0 %1146
        %1148 = vrot.lane.b32.xlu0 %v1125, 127
        %v1149 = vpop.permute.xlu0 %1148
        %v1158 = vmax.f32 %v1118, %v1135
        %v1159 = vmax.f32 %v1119, %v1137
        %v1160 = vmax.f32 %v1120, %v1139
        %v1161 = vmax.f32 %v1121, %v1141
        %v1162 = vmax.f32 %v1122, %v1143
        %v1163 = vmax.f32 %v1123, %v1145
        %v1164 = vmax.f32 %v1124, %v1147
        %v1165 = vmax.f32 %v1125, %v1149
        %1166 = vrot.lane.b32.xlu0 %v1118, 126
        %v1167 = vpop.permute.xlu0 %1166
        %1168 = vrot.lane.b32.xlu0 %v1119, 126
        %v1169 = vpop.permute.xlu0 %1168
        %1170 = vrot.lane.b32.xlu0 %v1120, 126
        %v1171 = vpop.permute.xlu0 %1170
        %1172 = vrot.lane.b32.xlu0 %v1121, 126
        %v1173 = vpop.permute.xlu0 %1172
        %1174 = vrot.lane.b32.xlu0 %v1122, 126
        %v1175 = vpop.permute.xlu0 %1174
        %1176 = vrot.lane.b32.xlu0 %v1123, 126
        %v1177 = vpop.permute.xlu0 %1176
        %1178 = vrot.lane.b32.xlu0 %v1124, 126
        %v1179 = vpop.permute.xlu0 %1178
        %1180 = vrot.lane.b32.xlu0 %v1125, 126
        %v1181 = vpop.permute.xlu0 %1180
        %v1190 = vmax.f32 %v1158, %v1167
        %v1191 = vmax.f32 %v1159, %v1169
        %v1192 = vmax.f32 %v1160, %v1171
        %v1193 = vmax.f32 %v1161, %v1173
        %v1194 = vmax.f32 %v1162, %v1175
        %v1195 = vmax.f32 %v1163, %v1177
        %v1196 = vmax.f32 %v1164, %v1179
        %v1197 = vmax.f32 %v1165, %v1181
        %1198 = vrot.lane.b32.xlu0 %v1118, 125
        %v1199 = vpop.permute.xlu0 %1198
        %1200 = vrot.lane.b32.xlu0 %v1119, 125
        %v1201 = vpop.permute.xlu0 %1200
        %1202 = vrot.lane.b32.xlu0 %v1120, 125
        %v1203 = vpop.permute.xlu0 %1202
        %1204 = vrot.lane.b32.xlu0 %v1121, 125
        %v1205 = vpop.permute.xlu0 %1204
        %1206 = vrot.lane.b32.xlu0 %v1122, 125
        %v1207 = vpop.permute.xlu0 %1206
        %1208 = vrot.lane.b32.xlu0 %v1123, 125
        %v1209 = vpop.permute.xlu0 %1208
        %1210 = vrot.lane.b32.xlu0 %v1124, 125
        %v1211 = vpop.permute.xlu0 %1210
        %1212 = vrot.lane.b32.xlu0 %v1125, 125
        %v1213 = vpop.permute.xlu0 %1212
        %v1222 = vmax.f32 %v1190, %v1199
        %v1223 = vmax.f32 %v1191, %v1201
        %v1224 = vmax.f32 %v1192, %v1203
        %v1225 = vmax.f32 %v1193, %v1205
        %v1226 = vmax.f32 %v1194, %v1207
        %v1227 = vmax.f32 %v1195, %v1209
        %v1228 = vmax.f32 %v1196, %v1211
        %v1229 = vmax.f32 %v1197, %v1213
        %1230 = vrot.lane.b32.xlu0 %v1118, 124
        %v1231 = vpop.permute.xlu0 %1230
        %1232 = vrot.lane.b32.xlu0 %v1119, 124
        %v1233 = vpop.permute.xlu0 %1232
        %1234 = vrot.lane.b32.xlu0 %v1120, 124
        %v1235 = vpop.permute.xlu0 %1234
        %1236 = vrot.lane.b32.xlu0 %v1121, 124
        %v1237 = vpop.permute.xlu0 %1236
        %1238 = vrot.lane.b32.xlu0 %v1122, 124
        %v1239 = vpop.permute.xlu0 %1238
        %1240 = vrot.lane.b32.xlu0 %v1123, 124
        %v1241 = vpop.permute.xlu0 %1240
        %1242 = vrot.lane.b32.xlu0 %v1124, 124
        %v1243 = vpop.permute.xlu0 %1242
        %1244 = vrot.lane.b32.xlu0 %v1125, 124
        %v1245 = vpop.permute.xlu0 %1244
        %v1254 = vmax.f32 %v1222, %v1231
        %v1255 = vmax.f32 %v1223, %v1233
        %v1256 = vmax.f32 %v1224, %v1235
        %v1257 = vmax.f32 %v1225, %v1237
        %v1258 = vmax.f32 %v1226, %v1239
        %v1259 = vmax.f32 %v1227, %v1241
        %v1260 = vmax.f32 %v1228, %v1243
        %v1261 = vmax.f32 %v1229, %v1245
        %v1262 = vld [vmem:[%s1] sm:$0x1]
        %v1263 = vld [vmem:[%s1 + $0x1] sm:$0x1]
        %v1264 = vld [vmem:[%s1 + $0x2] sm:$0x1]
        %v1265 = vld [vmem:[%s1 + $0x3] sm:$0x1]
        %v1270 = vperm.slane %v1262, 0
        %v1271 = vperm.slane %v1263, 0
        %v1272 = vperm.slane %v1264, 0
        %v1273 = vperm.slane %v1265, 0
        %1274 = vset.pattern.permute.xlu0 0
        %1275 = vperm.xlu0 %1274, %v1270
        %v1276 = vpop.permute.xlu0 %1275
        %1278 = vset.pattern.permute.xlu0 0
        %1279 = vperm.xlu0 %1278, %v1271
        %v1280 = vpop.permute.xlu0 %1279
        %1282 = vset.pattern.permute.xlu0 0
        %1283 = vperm.xlu0 %1282, %v1272
        %v1284 = vpop.permute.xlu0 %1283
        %1286 = vset.pattern.permute.xlu0 0
        %1287 = vperm.xlu0 %1286, %v1273
        %v1288 = vpop.permute.xlu0 %1287
        %v1290 = vmul.f32 %v1276, %v1254
        %v1291 = vmul.f32 %v1276, %v1255
        %v1292 = vmul.f32 %v1280, %v1256
        %v1293 = vmul.f32 %v1280, %v1257
        %v1294 = vmul.f32 %v1284, %v1258
        %v1295 = vmul.f32 %v1284, %v1259
        %v1296 = vmul.f32 %v1288, %v1260
        %v1297 = vmul.f32 %v1288, %v1261
        %vm1298 = vcmask 89088
        %v1299 = vsel %vm1298, %v1290, 0.0
        %v1300 = vsel %vm1298, %v1292, 0.0
        %v1301 = vadd.f32 %v1299, %v1300
        %v1302 = vsel %vm1298, %v1294, 0.0
        %v1303 = vadd.f32 %v1301, %v1302
        %v1304 = vsel %vm1298, %v1296, 0.0
        %v1305 = vadd.f32 %v1303, %v1304
        %vm1306 = vcmask 83968
        %v1307 = vsel %vm1306, %v1291, 0.0
        %v1308 = vsel %vm1306, %v1293, 0.0
        %v1309 = vadd.f32 %v1307, %v1308
        %v1310 = vsel %vm1306, %v1295, 0.0
        %v1311 = vadd.f32 %v1309, %v1310
        %v1312 = vsel %vm1306, %v1297, 0.0
        %v1313 = vadd.f32 %v1311, %v1312
        %v1314 = vadd.f32 %v1305, 0.0
        %v1315 = vadd.f32 %v1313, 0.0
        %v1316 = vld [vmem:[#allocation2] sm:$0x1]
        %v1318 = vperm.slane %v1316, 0
        %1319 = vset.pattern.permute.xlu0 0
        %1320 = vperm.xlu0 %1319, %v1318
        %v1321 = vpop.permute.xlu0 %1320
        %v1323 = vadd.f32 %v1314, %v1321
        %v1324 = vadd.f32 %v1315, %v1321
        %v1325 = vld [vmem:[#allocation11] sm:$0xff]
        %v1326 = vld [vmem:[#allocation11 + $0x8] sm:$0xff]
        %v1328 = vsel %vm1298, %v1323, 0
        %v1331 = vsel %vm1298, %v1324, 0
        %v1334 = vsel %vm1298, %v1325, 0
        %v1337 = vsel %vm1298, %v1326, 0
        %1339 = vmatpush.xpose.msra.mxu0 0.0
        %1340 = vmatpush.xpose.msra.mxu0 0.0
        %1341 = vmatpush.xpose.msra.mxu0 0.0
        %1342 = vmatpush.xpose.msra.mxu0 0.0
        %1343 = vmatpush.xpose.msra.mxu0 0.0
        %1344 = vmatpush.xpose.msra.mxu0 0.0
        %1345 = vmatpush.xpose.msra.mxu0 0.0
        %1346 = vmatpush.xpose.msra.mxu0 0.0
        %1347 = vmatpush.xpose.msra.mxu0 0.0
        %1348 = vmatpush.xpose.msra.mxu0 0.0
        %1349 = vmatpush.xpose.msra.mxu0 0.0
        %1350 = vmatpush.xpose.msra.mxu0 0.0
        %1351 = vmatpush.xpose.msra.mxu0 0.0
        %1352 = vmatpush.xpose.msra.mxu0 0.0
        %1353 = vmatpush.xpose.msra.mxu0 %v1337
        %1354 = vmatpush.xpose.msra.mxu0 %v1334
        %1355 = vmatmul.f32.gmra.mxu0 %v1328
        %v1356 = vpop.f32.mrf.mxu0
        %v1357 = vadd.f32 0.0, %v1356
        %1358 = vmatmul.f32.gmra.mxu0 %v1331
        %v1359 = vpop.f32.mrf.mxu0
        %v1360 = vadd.f32 0.0, %v1359
        %1361 = vdwg.mxu0
        %v1362 = vld [vmem:[#allocation9] sm:$0xff]
        %v1363 = vld [vmem:[#allocation9 + $0x8] sm:$0xff]
        %v1365 = vsel %vm1298, %v1362, 0
        %v1368 = vsel %vm1298, %v1363, 0
        %vm1370 = vcmask 1042432
        %v1372 = vsel %vm1370, %v1360, 0
        %1374 = vmatpush.msra.mxu0 0.0
        %1375 = vmatpush.msra.mxu0 0.0
        %1376 = vmatpush.msra.mxu0 0.0
        %1377 = vmatpush.msra.mxu0 0.0
        %1378 = vmatpush.msra.mxu0 0.0
        %1379 = vmatpush.msra.mxu0 0.0
        %1380 = vmatpush.msra.mxu0 0.0
        %1381 = vmatpush.msra.mxu0 0.0
        %1382 = vmatpush.msra.mxu0 0.0
        %1383 = vmatpush.msra.mxu0 0.0
        %1384 = vmatpush.msra.mxu0 0.0
        %1385 = vmatpush.msra.mxu0 0.0
        %1386 = vmatpush.msra.mxu0 0.0
        %1387 = vmatpush.msra.mxu0 0.0
        %1388 = vmatpush.msra.mxu0 %v1372
        %1389 = vmatpush.msra.mxu0 %v1357
        %1390 = vmatmul.f32.gmra.mxu0 %v1365
        %v1391 = vpop.f32.mrf.mxu0
        %v1392 = vadd.f32 0.0, %v1391
        %1393 = vmatmul.f32.gmra.mxu0 %v1368
        %v1394 = vpop.f32.mrf.mxu0
        %v1395 = vadd.f32 0.0, %v1394
        %1396 = vdwg.mxu0
        %s1397 = scalar_lea.vmem %s474, 32 [#allocation12]
        %1398 = vst.msk [vmem:[%s1397] sm:$0xff] %vm484, %v1392
        %1399 = vst.msk [vmem:[%s1397 + $0x8] sm:$0xff] %vm484, %v1395
        %v1400 = vld [vmem:[%s415] sm:$0xff]
        %v1401 = vld [vmem:[%s415 + $0x8] sm:$0xff]
        %v1402 = vld [vmem:[%s415 + $0x10] sm:$0xff]
        %v1403 = vld [vmem:[%s415 + $0x18] sm:$0xff]
        %v1404 = vld [vmem:[%s415 + $0x20] sm:$0xff]
        %v1405 = vld [vmem:[%s415 + $0x28] sm:$0xff]
        %v1406 = vld [vmem:[%s415 + $0x30] sm:$0xff]
        %v1407 = vld [vmem:[%s415 + $0x38] sm:$0xff]
        %v1412 = vrot.slane %v1400, 1
        %v1413 = vrot.slane %v1402, 1
        %v1414 = vrot.slane %v1404, 1
        %v1415 = vrot.slane %v1406, 1
        %v1420 = vmax.f32 %v1400, %v1412
        %v1421 = vmax.f32 %v1402, %v1413
        %v1422 = vmax.f32 %v1404, %v1414
        %v1423 = vmax.f32 %v1406, %v1415
        %v1428 = vrot.slane %v1400, 2
        %v1429 = vrot.slane %v1401, 2
        %v1430 = vsel %vm758, %v1428, %v1429
        %v1431 = vrot.slane %v1402, 2
        %v1432 = vrot.slane %v1403, 2
        %v1433 = vsel %vm758, %v1431, %v1432
        %v1434 = vrot.slane %v1404, 2
        %v1435 = vrot.slane %v1405, 2
        %v1436 = vsel %vm758, %v1434, %v1435
        %v1437 = vrot.slane %v1406, 2
        %v1438 = vrot.slane %v1407, 2
        %v1439 = vsel %vm758, %v1437, %v1438
        %v1444 = vmax.f32 %v1420, %v1430
        %v1445 = vmax.f32 %v1421, %v1433
        %v1446 = vmax.f32 %v1422, %v1436
        %v1447 = vmax.f32 %v1423, %v1439
        %v1448 = vrot.slane %v1400, 3
        %v1449 = vrot.slane %v1401, 3
        %v1450 = vsel %vm967, %v1448, %v1449
        %v1451 = vrot.slane %v1402, 3
        %v1452 = vrot.slane %v1403, 3
        %v1453 = vsel %vm967, %v1451, %v1452
        %v1454 = vrot.slane %v1404, 3
        %v1455 = vrot.slane %v1405, 3
        %v1456 = vsel %vm967, %v1454, %v1455
        %v1457 = vrot.slane %v1406, 3
        %v1458 = vrot.slane %v1407, 3
        %v1459 = vsel %vm967, %v1457, %v1458
        %v1464 = vmax.f32 %v1444, %v1450
        %v1465 = vmax.f32 %v1445, %v1453
        %v1466 = vmax.f32 %v1446, %v1456
        %v1467 = vmax.f32 %v1447, %v1459
        %v1468 = vrot.slane %v1400, 4
        %v1469 = vrot.slane %v1401, 4
        %v1470 = vsel %vm1097, %v1468, %v1469
        %v1471 = vrot.slane %v1402, 4
        %v1472 = vrot.slane %v1403, 4
        %v1473 = vsel %vm1097, %v1471, %v1472
        %v1474 = vrot.slane %v1404, 4
        %v1475 = vrot.slane %v1405, 4
        %v1476 = vsel %vm1097, %v1474, %v1475
        %v1477 = vrot.slane %v1406, 4
        %v1478 = vrot.slane %v1407, 4
        %v1479 = vsel %vm1097, %v1477, %v1478
        %v1484 = vmax.f32 %v1464, %v1470
        %v1485 = vmax.f32 %v1465, %v1473
        %v1486 = vmax.f32 %v1466, %v1476
        %v1487 = vmax.f32 %v1467, %v1479
        %v1488 = vrot.slane %v1400, 5
        %v1489 = vrot.slane %v1401, 5
        %v1490 = vsel %vm1370, %v1488, %v1489
        %v1491 = vrot.slane %v1402, 5
        %v1492 = vrot.slane %v1403, 5
        %v1493 = vsel %vm1370, %v1491, %v1492
        %v1494 = vrot.slane %v1404, 5
        %v1495 = vrot.slane %v1405, 5
        %v1496 = vsel %vm1370, %v1494, %v1495
        %v1497 = vrot.slane %v1406, 5
        %v1498 = vrot.slane %v1407, 5
        %v1499 = vsel %vm1370, %v1497, %v1498
        %v1504 = vmax.f32 %v1484, %v1490
        %v1505 = vmax.f32 %v1485, %v1493
        %v1506 = vmax.f32 %v1486, %v1496
        %v1507 = vmax.f32 %v1487, %v1499
        %1512 = vrot.lane.b32.xlu0 %v1504, 127
        %v1513 = vpop.permute.xlu0 %1512
        %1514 = vrot.lane.b32.xlu0 %v1505, 127
        %v1515 = vpop.permute.xlu0 %1514
        %1516 = vrot.lane.b32.xlu0 %v1506, 127
        %v1517 = vpop.permute.xlu0 %1516
        %1518 = vrot.lane.b32.xlu0 %v1507, 127
        %v1519 = vpop.permute.xlu0 %1518
        %v1524 = vmax.f32 %v1504, %v1513
        %v1525 = vmax.f32 %v1505, %v1515
        %v1526 = vmax.f32 %v1506, %v1517
        %v1527 = vmax.f32 %v1507, %v1519
        %1528 = vrot.lane.b32.xlu0 %v1504, 126
        %v1529 = vpop.permute.xlu0 %1528
        %1530 = vrot.lane.b32.xlu0 %v1505, 126
        %v1531 = vpop.permute.xlu0 %1530
        %1532 = vrot.lane.b32.xlu0 %v1506, 126
        %v1533 = vpop.permute.xlu0 %1532
        %1534 = vrot.lane.b32.xlu0 %v1507, 126
        %v1535 = vpop.permute.xlu0 %1534
        %v1540 = vmax.f32 %v1524, %v1529
        %v1541 = vmax.f32 %v1525, %v1531
        %v1542 = vmax.f32 %v1526, %v1533
        %v1543 = vmax.f32 %v1527, %v1535
        %1544 = vrot.lane.b32.xlu0 %v1504, 125
        %v1545 = vpop.permute.xlu0 %1544
        %1546 = vrot.lane.b32.xlu0 %v1505, 125
        %v1547 = vpop.permute.xlu0 %1546
        %1548 = vrot.lane.b32.xlu0 %v1506, 125
        %v1549 = vpop.permute.xlu0 %1548
        %1550 = vrot.lane.b32.xlu0 %v1507, 125
        %v1551 = vpop.permute.xlu0 %1550
        %v1556 = vmax.f32 %v1540, %v1545
        %v1557 = vmax.f32 %v1541, %v1547
        %v1558 = vmax.f32 %v1542, %v1549
        %v1559 = vmax.f32 %v1543, %v1551
        %1560 = vrot.lane.b32.xlu0 %v1504, 124
        %v1561 = vpop.permute.xlu0 %1560
        %1562 = vrot.lane.b32.xlu0 %v1505, 124
        %v1563 = vpop.permute.xlu0 %1562
        %1564 = vrot.lane.b32.xlu0 %v1506, 124
        %v1565 = vpop.permute.xlu0 %1564
        %1566 = vrot.lane.b32.xlu0 %v1507, 124
        %v1567 = vpop.permute.xlu0 %1566
        %v1572 = vmax.f32 %v1556, %v1561
        %v1573 = vmax.f32 %v1557, %v1563
        %v1574 = vmax.f32 %v1558, %v1565
        %v1575 = vmax.f32 %v1559, %v1567
        %1576 = vrot.lane.b32.xlu0 %v1504, 123
        %v1577 = vpop.permute.xlu0 %1576
        %1578 = vrot.lane.b32.xlu0 %v1505, 123
        %v1579 = vpop.permute.xlu0 %1578
        %1580 = vrot.lane.b32.xlu0 %v1506, 123
        %v1581 = vpop.permute.xlu0 %1580
        %1582 = vrot.lane.b32.xlu0 %v1507, 123
        %v1583 = vpop.permute.xlu0 %1582
        %v1588 = vmax.f32 %v1572, %v1577
        %v1589 = vmax.f32 %v1573, %v1579
        %v1590 = vmax.f32 %v1574, %v1581
        %v1591 = vmax.f32 %v1575, %v1583
        %v1592 = vld [vmem:[%s1] sm:$0x1]
        %v1593 = vld [vmem:[%s1 + $0x1] sm:$0x1]
        %v1594 = vld [vmem:[%s1 + $0x2] sm:$0x1]
        %v1595 = vld [vmem:[%s1 + $0x3] sm:$0x1]
        %v1600 = vperm.slane %v1592, 0
        %v1601 = vperm.slane %v1593, 0
        %v1602 = vperm.slane %v1594, 0
        %v1603 = vperm.slane %v1595, 0
        %1604 = vset.pattern.permute.xlu0 0
        %1605 = vperm.xlu0 %1604, %v1600
        %v1606 = vpop.permute.xlu0 %1605
        %1608 = vset.pattern.permute.xlu0 0
        %1609 = vperm.xlu0 %1608, %v1601
        %v1610 = vpop.permute.xlu0 %1609
        %1612 = vset.pattern.permute.xlu0 0
        %1613 = vperm.xlu0 %1612, %v1602
        %v1614 = vpop.permute.xlu0 %1613
        %1616 = vset.pattern.permute.xlu0 0
        %1617 = vperm.xlu0 %1616, %v1603
        %v1618 = vpop.permute.xlu0 %1617
        %v1620 = vmul.f32 %v1606, %v1588
        %v1621 = vmul.f32 %v1610, %v1589
        %v1622 = vmul.f32 %v1614, %v1590
        %v1623 = vmul.f32 %v1618, %v1591
        %vm1624 = vcmask 55296
        %v1625 = vsel %vm1624, %v1620, 0.0
        %v1626 = vsel %vm1624, %v1621, 0.0
        %v1627 = vadd.f32 %v1625, %v1626
        %v1628 = vsel %vm1624, %v1622, 0.0
        %v1629 = vadd.f32 %v1627, %v1628
        %v1630 = vsel %vm1624, %v1623, 0.0
        %v1631 = vadd.f32 %v1629, %v1630
        %v1632 = vadd.f32 %v1631, 0.0
        %v1633 = vld [vmem:[#allocation2] sm:$0x1]
        %v1635 = vperm.slane %v1633, 0
        %1636 = vset.pattern.permute.xlu0 0
        %1637 = vperm.xlu0 %1636, %v1635
        %v1638 = vpop.permute.xlu0 %1637
        %v1640 = vadd.f32 %v1632, %v1638
        %v1641 = vld [vmem:[%s10] sm:$0xff]
        %v1642 = vld [vmem:[%s10 + $0x8] sm:$0xff]
        %vm1643 = vcmask 56320
        %v1645 = vsel %vm1643, %v1640, 0
        %v1648 = vsel %vm1643, %v1641, 0
        %v1651 = vsel %vm1643, %v1642, 0
        %1653 = vmatpush.xpose.msra.mxu0 0.0
        %1654 = vmatpush.xpose.msra.mxu0 0.0
        %1655 = vmatpush.xpose.msra.mxu0 0.0
        %1656 = vmatpush.xpose.msra.mxu0 0.0
        %1657 = vmatpush.xpose.msra.mxu0 0.0
        %1658 = vmatpush.xpose.msra.mxu0 0.0
        %1659 = vmatpush.xpose.msra.mxu0 0.0
        %1660 = vmatpush.xpose.msra.mxu0 0.0
        %1661 = vmatpush.xpose.msra.mxu0 0.0
        %1662 = vmatpush.xpose.msra.mxu0 0.0
        %1663 = vmatpush.xpose.msra.mxu0 0.0
        %1664 = vmatpush.xpose.msra.mxu0 0.0
        %1665 = vmatpush.xpose.msra.mxu0 0.0
        %1666 = vmatpush.xpose.msra.mxu0 0.0
        %1667 = vmatpush.xpose.msra.mxu0 %v1651
        %1668 = vmatpush.xpose.msra.mxu0 %v1648
        %1669 = vmatmul.f32.gmra.mxu0 %v1645
        %v1670 = vpop.f32.mrf.mxu0
        %v1671 = vadd.f32 0.0, %v1670
        %1672 = vdwg.mxu0
        %v1673 = vld [vmem:[%s9] sm:$0xff]
        %v1674 = vld [vmem:[%s9 + $0x8] sm:$0xff]
        %v1676 = vsel %vm1643, %v1673, 0
        %v1679 = vsel %vm1643, %v1674, 0
        %v1682 = vsel %vm509, %v1671, 0
        %1684 = vmatpush.msra.mxu0 0.0
        %1685 = vmatpush.msra.mxu0 0.0
        %1686 = vmatpush.msra.mxu0 0.0
        %1687 = vmatpush.msra.mxu0 0.0
        %1688 = vmatpush.msra.mxu0 0.0
        %1689 = vmatpush.msra.mxu0 0.0
        %1690 = vmatpush.msra.mxu0 0.0
        %1691 = vmatpush.msra.mxu0 0.0
        %1692 = vmatpush.msra.mxu0 0.0
        %1693 = vmatpush.msra.mxu0 0.0
        %1694 = vmatpush.msra.mxu0 0.0
        %1695 = vmatpush.msra.mxu0 0.0
        %1696 = vmatpush.msra.mxu0 0.0
        %1697 = vmatpush.msra.mxu0 0.0
        %1698 = vmatpush.msra.mxu0 0.0
        %1699 = vmatpush.msra.mxu0 %v1682
        %1700 = vmatmul.f32.gmra.mxu0 %v1676
        %v1701 = vpop.f32.mrf.mxu0
        %v1702 = vadd.f32 0.0, %v1701
        %1703 = vmatmul.f32.gmra.mxu0 %v1679
        %v1704 = vpop.f32.mrf.mxu0
        %v1705 = vadd.f32 0.0, %v1704
        %1706 = vdwg.mxu0
        %s1707 = scalar_lea.vmem %s474, 48 [#allocation12]
        %1708 = vst.msk [vmem:[%s1707] sm:$0xff] %vm484, %v1702
        %1709 = vst.msk [vmem:[%s1707 + $0x8] sm:$0xff] %vm484, %v1705
        %s1710 = sand.u32 %s276, 1
        %s1711 = scalar_lea.sflag [#allocation5], %s1710
        %s1712 = sand.u32 %s276, 1
        %s1713 = smul.addr %s1712, 128
        %s1714 = scalar_lea.vmem [#allocation12], %s1713
        // Predicated region
        $region85: #{tpu_custom_call.1} parent=63 // pred_check
          %p1715 = pneg %p286
        $region86: #{tpu_custom_call.1} parent=63 // pred_check_branch
          %1717 = sbr.rel (%p1715) target = $region88
        $region87: #{tpu_custom_call.1} parent=63 // pred_region
          %1719 = vsyncadd %s1711, 0
          %s1720 = smul.addr %s32, 16
          %s1721 = smul.addr %s1720, 8
          %s1722 = scalar_lea.hbm %s11, %s1721
          %s1723 = sshll.u32 %s1714, 4
          %s1724 = int_to_ptr.vmem [resolvable:$true] %s1723
          %s1725 = sshll.u32 %s1722, 4
          %s1726 = int_to_ptr.hbm [resolvable:$true] %s1725
          %1731 = dma.vmem_to_hbm [thread:$0]  %s1724, 2048, %s1726, %s1711, 128, 128, 8
        $region88: #{tpu_custom_call.1} parent=63 // pred_fallthru
          _
      $region64: #{tpu_custom_call.1} parent=5 // pred_fallthru
        _
      %p1732 = scmp.le.s32.totalorder 2, %s27
      // Predicated region
      $region89: #{tpu_custom_call.1} parent=5 // pred_check
        %p1733 = pneg %p1732
      $region90: #{tpu_custom_call.1} parent=5 // pred_check_branch
        %1735 = sbr.rel (%p1733) target = $region92
      $region91: #{tpu_custom_call.1} parent=5 // pred_region
        %s1736 = ssub.s32 %s27, 2
        // Predicated region
        $region93: #{tpu_custom_call.1} parent=91 // pred_check
          %p1737 = pneg %p292
        $region94: #{tpu_custom_call.1} parent=91 // pred_check_branch
          %1739 = sbr.rel (%p1737) target = $region96
        $region95: #{tpu_custom_call.1} parent=91 // pred_region
          %s1740 = sand.u32 %s277, 1
          %s1741 = scalar_lea.sflag [#allocation5], %s1740
          %s1742 = sand.u32 %s277, 1
          %s1743 = smul.addr %s1742, 128
          %s1744 = scalar_lea.vmem [#allocation12], %s1743
          %1746 = dma.done %s1741, 2048
        $region96: #{tpu_custom_call.1} parent=91 // pred_fallthru
          _
      $region92: #{tpu_custom_call.1} parent=5 // pred_fallthru
        _
    $region6: #{tpu_custom_call.1} parent=1 // loop_footer
      %s31 = sadd.s32 1, %s27
    $region7: #{tpu_custom_call.1} parent=1 // loop_footer_branch
      %26 = sbr.rel target = $region3
    $region8: #{tpu_custom_call.1} parent=1 // loop_exit
      _
    %1747 = vsyncpa [#allocation4], 1
    %s1748 = scalar_lea.sflag [#allocation4], 1
    %1749 = vsyncpa %s1748, 1
    %1750 = vsyncpa [#allocation7], 1
    %1751 = vsyncpa [#allocation10], 1
    %1752 = vsyncpa [#allocation5], 1
    %s1753 = scalar_lea.sflag [#allocation5], 1
    %1754 = vsyncpa %s1753, 1

</llo_original>
